<compile_context>
chip_gen: v5e
topology: v5e:2x2
jax: 0.10.0
libtpu: 0.0.40
codegen_flags: <defaults>
</compile_context>

<pallas_src>
import math
import jax
import jax.numpy as jnp
from jax.experimental import pallas as pl
from jax.experimental.pallas import tpu as pltpu

# ---- StyleEncoder hyper-parameters (small, consistent with the module) ----
B = 2                    # batch
T = 8                    # sequence length
IN_DIM = 16              # config.n_mel_channels
HID = 32                 # config.style_hidden (d_model)
OUT_DIM = 32             # config.style_vector_dim
KSIZE = 5                # config.style_kernel_size (odd)
PAD = (KSIZE - 1) // 2
N_HEAD = 2               # config.style_head
D_K = HID // N_HEAD
D_V = HID // N_HEAD
INV_TEMP = 1.0 / math.sqrt(HID)   # ScaledDotProductAttention temperature = d_model ** 0.5

F32 = jnp.float32
BF16 = jnp.bfloat16


def _mm(a, w_bf16):
    """activation (f32) x weight (already bf16) -> f32 MXU matmul."""
    return jnp.dot(a.astype(BF16), w_bf16, preferred_element_type=F32)


def _softplus(x):
    """Numerically stable softplus: max(x,0) + log1p(exp(-|x|))."""
    return jnp.maximum(x, 0.0) + jnp.log1p(jnp.exp(-jnp.abs(x)))


def _mish(x):
    return x * jnp.tanh(_softplus(x))


def _sigmoid(x):
    """sigmoid via tanh (EUP path, avoids a VPU divide)."""
    return 0.5 * (jnp.tanh(0.5 * x) + 1.0)


def style_encoder_kernel(x_ref,                       # (T, IN_DIM) f32 (batch-squeezed)
                         w1_ref, b1_ref,              # spectral Linear 1 (bf16 / f32)
                         w2_ref, b2_ref,              # spectral Linear 2
                         wcv1_ref, wcg1_ref, bcv1_ref, bcg1_ref,   # Conv1dGLU 1 (val/gate split)
                         wcv2_ref, wcg2_ref, bcv2_ref, bcg2_ref,   # Conv1dGLU 2
                         wqkv_ref, bqkv_ref,          # fused Q|K|V: (HID, 3*HID), (1, 3*HID)
                         wf_ref, bf_ref,              # attn output proj: (HID, HID), (1, HID)
                         wo_ref, bo_ref,              # final fc: (HID, OUT_DIM), (1, OUT_DIM)
                         out_ref):                    # (1, OUT_DIM) f32 (batch-squeezed)
    x = x_ref[...]                                             # (T, IN_DIM) f32

    # ---- spectral: Linear -> Mish -> Linear -> Mish (dropout p=0) ----
    h = _mish(_mm(x, w1_ref[...]) + b1_ref[...])
    h = _mish(_mm(h, w2_ref[...]) + b2_ref[...])               # (T, HID) f32

    # ---- temporal: two Conv1dGLU blocks ('same' zero padding, residual) ----
    row = jax.lax.broadcasted_iota(jnp.int32, (T, HID), 0)

    def shift_rows(z, d):
        """out[t] = z[t + d], zero where t + d falls outside [0, T)."""
        if d == 0:
            return z
        s = pltpu.roll(z, shift=(-d) % T, axis=0)              # XLU sublane rotate
        if d > 0:
            return jnp.where(row < T - d, s, 0.0)
        return jnp.where(row >= -d, s, 0.0)

    def conv_glu(z, wcv_ref, wcg_ref, bcv_ref, bcg_ref):
        pre_v = jnp.zeros((T, HID), F32)
        pre_g = jnp.zeros((T, HID), F32)
        for k in range(KSIZE):                                 # K=5, static unroll
            sh = shift_rows(z, k - PAD).astype(BF16)           # (T, HID) bf16
            pre_v = pre_v + jnp.dot(sh, wcv_ref[k], preferred_element_type=F32)
            pre_g = pre_g + jnp.dot(sh, wcg_ref[k], preferred_element_type=F32)
        pre_v = pre_v + bcv_ref[...]
        pre_g = pre_g + bcg_ref[...]
        return z + pre_v * _sigmoid(pre_g)                     # GLU + residual (f32)

    h = conv_glu(h, wcv1_ref, wcg1_ref, bcv1_ref, bcg1_ref)
    h = conv_glu(h, wcv2_ref, wcg2_ref, bcv2_ref, bcg2_ref)    # (T, HID) f32

    # ---- multi-head self-attention (mask=None, dropout p=0) ----
    qkv = _mm(h, wqkv_ref[...]) + bqkv_ref[...]                # (T, 3*HID) fused QKV
    q = qkv[:, :HID] * INV_TEMP                                # fold 1/temperature into q
    km = qkv[:, HID:2 * HID]
    vm = qkv[:, 2 * HID:]
    wf = wf_ref[...]                                           # (HID, HID) bf16

    acc = h + bf_ref[...]                                      # residual + fc bias (f32)
    for hd in range(N_HEAD):                                   # N_HEAD=2, static unroll
        c0 = hd * D_K
        qh = q[:, c0:c0 + D_K].astype(BF16)                    # (T, D_K)
        kh = km[:, c0:c0 + D_K].astype(BF16)                   # (T, D_K)
        vh = vm[:, hd * D_V:(hd + 1) * D_V].astype(BF16)       # (T, D_V)
        # contract last dims directly (no explicit kh.T transpose)
        s = jax.lax.dot_general(qh, kh, (((1,), (1,)), ((), ())),
                                preferred_element_type=F32)    # (T, T) scaled scores
        m = jnp.max(s, axis=-1, keepdims=True)
        e = jnp.exp(s - m)
        p = e * pl.reciprocal(jnp.sum(e, axis=-1, keepdims=True), approx=True)
        ctx = jnp.dot(p.astype(BF16), vh, preferred_element_type=F32)   # (T, D_V)
        # fold head-concat + fc: accumulate ctx @ wf[head rows, :]
        acc = acc + jnp.dot(ctx.astype(BF16), wf[hd * D_V:(hd + 1) * D_V, :],
                            preferred_element_type=F32)

    # ---- mean pool commuted with final fc: mean_T(a) @ wo + bo ----
    pooled = jnp.mean(acc, axis=0, keepdims=True)              # (1, HID) f32
    y = _mm(pooled, wo_ref[...]) + bo_ref[...]                 # (1, OUT_DIM)
    out_ref[...] = y.astype(out_ref.dtype)


def style_encoder_forward(x, params):
    """x: (B, T, IN_DIM) f32  ->  style vector w: (B, OUT_DIM) f32."""
    (w1, b1, w2, b2, wcv1, wcg1, bcv1, bcg1, wcv2, wcg2, bcv2, bcg2,
     wqkv, bqkv, wf, bf, wo, bo) = params

    # matmul weights go in as bf16 (cast once here); biases stay f32
    ops = (w1.astype(BF16), b1, w2.astype(BF16), b2,
           wcv1.astype(BF16), wcg1.astype(BF16), bcv1, bcg1,
           wcv2.astype(BF16), wcg2.astype(BF16), bcv2, bcg2,
           wqkv.astype(BF16), bqkv, wf.astype(BF16), bf,
           wo.astype(BF16), bo)

    in_specs = [pl.BlockSpec((None, T, IN_DIM), lambda b: (b, 0, 0))]
    for p in ops:
        # full array, constant block index -> not re-fetched across grid steps
        in_specs.append(pl.BlockSpec(p.shape, lambda b, z=(0,) * p.ndim: z))

    out = pl.pallas_call(
        style_encoder_kernel,
        out_shape=jax.ShapeDtypeStruct((B, 1, OUT_DIM), F32),
        grid_spec=pltpu.PrefetchScalarGridSpec(
            num_scalar_prefetch=0,
            grid=(B,),
            in_specs=in_specs,
            out_specs=pl.BlockSpec((None, 1, OUT_DIM), lambda b: (b, 0, 0)),
        ),
        compiler_params=pltpu.CompilerParams(
            dimension_semantics=("parallel",)),   # batch items -> both TCs on v7x
    )(x, *ops)
    return out.reshape(B, OUT_DIM)


def init_params(key):
    """Deterministic synthetic parameters.
    Linear weights stored (in, out); Conv1d weights (K, C_in, C_out) split into
    value/gate halves; Q/K/V weights pre-concatenated column-wise (HID, 3*HID)."""
    ks = jax.random.split(key, 18)
    s = 0.1

    def n(i, shape):
        return s * jax.random.normal(ks[i], shape, F32)

    w1, b1 = n(0, (IN_DIM, HID)), n(1, (1, HID))
    w2, b2 = n(2, (HID, HID)), n(3, (1, HID))
    wcv1, wcg1 = n(4, (KSIZE, HID, HID)), n(5, (KSIZE, HID, HID))
    bcv1, bcg1 = n(6, (1, HID)), n(7, (1, HID))
    wcv2, wcg2 = n(8, (KSIZE, HID, HID)), n(9, (KSIZE, HID, HID))
    bcv2, bcg2 = n(10, (1, HID)), n(11, (1, HID))
    wqkv, bqkv = n(12, (HID, 3 * HID)), n(13, (1, 3 * HID))
    wf, bf = n(14, (HID, HID)), n(15, (1, HID))
    wo, bo = n(16, (HID, OUT_DIM)), n(17, (1, OUT_DIM))
    return (w1, b1, w2, b2, wcv1, wcg1, bcv1, bcg1, wcv2, wcg2, bcv2, bcg2,
            wqkv, bqkv, wf, bf, wo, bo)


def reference_style_encoder(x, params):
    """Pure-JAX reference mirroring the PyTorch forward (dropout p=0, mask=None).
    Same precision policy as the kernel: bf16 matmul operands with f32
    accumulation, element-wise math in f32."""
    (w1, b1, w2, b2, wcv1, wcg1, bcv1, bcg1, wcv2, wcg2, bcv2, bcg2,
     wqkv, bqkv, wf, bf, wo, bo) = params
    wq, wk, wv = wqkv[:, :HID], wqkv[:, HID:2 * HID], wqkv[:, 2 * HID:]
    bq, bk, bv = bqkv[:, :HID], bqkv[:, HID:2 * HID], bqkv[:, 2 * HID:]

    def mm3(a, b):   # (B, T, Ci) x (Ci, Co): bf16 inputs, f32 accumulation
        return jnp.einsum('bti,io->bto', a.astype(BF16), b.astype(BF16),
                          preferred_element_type=F32)

    # spectral
    h = _mish(mm3(x, w1) + b1)
    h = _mish(mm3(h, w2) + b2)

    # temporal: Conv1dGLU x2 (residual + GLU, 'same' zero padding over time)
    def conv_glu(z, wcv, wcg, bcv, bcg):
        zp = jnp.pad(z, ((0, 0), (PAD, PAD), (0, 0)))
        pre_v = sum(mm3(zp[:, k:k + T, :], wcv[k]) for k in range(KSIZE)) + bcv
        pre_g = sum(mm3(zp[:, k:k + T, :], wcg[k]) for k in range(KSIZE)) + bcg
        return z + pre_v * _sigmoid(pre_g)

    h = conv_glu(h, wcv1, wcg1, bcv1, bcg1)
    h = conv_glu(h, wcv2, wcg2, bcv2, bcg2)

    # multi-head self-attention (torch-style head reshuffle)
    q = (mm3(h, wq) + bq).reshape(B, T, N_HEAD, D_K).transpose(2, 0, 1, 3).reshape(-1, T, D_K)
    k = (mm3(h, wk) + bk).reshape(B, T, N_HEAD, D_K).transpose(2, 0, 1, 3).reshape(-1, T, D_K)
    v = (mm3(h, wv) + bv).reshape(B, T, N_HEAD, D_V).transpose(2, 0, 1, 3).reshape(-1, T, D_V)
    attn = jnp.einsum('bqd,bkd->bqk', q.astype(BF16), k.astype(BF16),
                      preferred_element_type=F32) / math.sqrt(HID)
    attn = jax.nn.softmax(attn, axis=2)
    ctx = jnp.einsum('bqk,bkd->bqd', attn.astype(BF16), v.astype(BF16),
                     preferred_element_type=F32)
    ctx = ctx.reshape(N_HEAD, B, T, D_V).transpose(1, 2, 0, 3).reshape(B, T, N_HEAD * D_V)
    h = mm3(ctx, wf) + bf + h

    # final fc + temporal average pool
    y = mm3(h, wo) + bo
    return jnp.mean(y, axis=1)


if __name__ == "__main__":
    key = jax.random.PRNGKey(0)
    kx, kp = jax.random.split(key)
    x = jax.random.normal(kx, (B, T, IN_DIM), F32)
    params = init_params(kp)

    w = style_encoder_forward(x, params)
    w = jax.block_until_ready(w)
    assert w.shape == (B, OUT_DIM)

    w_ref = reference_style_encoder(x, params)
    max_diff = float(jnp.max(jnp.abs(w - w_ref)))
    assert jnp.allclose(w, w_ref, atol=2e-2, rtol=2e-2), f"mismatch, max abs diff = {max_diff}"

    print("KERNEL_OK")
</pallas_src>

<mosaic_0001>
module attributes {stable_mosaic.version = 11 : i64} {
  func.func @style_encoder_kernel(%arg0: i32, %arg1: memref<1x8x16xf32, #tpu.memory_space<vmem>>, %arg2: memref<16x32xbf16, #tpu.memory_space<vmem>>, %arg3: memref<1x32xf32, #tpu.memory_space<vmem>>, %arg4: memref<32x32xbf16, #tpu.memory_space<vmem>>, %arg5: memref<1x32xf32, #tpu.memory_space<vmem>>, %arg6: memref<5x32x32xbf16, #tpu.memory_space<vmem>>, %arg7: memref<5x32x32xbf16, #tpu.memory_space<vmem>>, %arg8: memref<1x32xf32, #tpu.memory_space<vmem>>, %arg9: memref<1x32xf32, #tpu.memory_space<vmem>>, %arg10: memref<5x32x32xbf16, #tpu.memory_space<vmem>>, %arg11: memref<5x32x32xbf16, #tpu.memory_space<vmem>>, %arg12: memref<1x32xf32, #tpu.memory_space<vmem>>, %arg13: memref<1x32xf32, #tpu.memory_space<vmem>>, %arg14: memref<32x96xbf16, #tpu.memory_space<vmem>>, %arg15: memref<1x96xf32, #tpu.memory_space<vmem>>, %arg16: memref<32x32xbf16, #tpu.memory_space<vmem>>, %arg17: memref<1x32xf32, #tpu.memory_space<vmem>>, %arg18: memref<32x32xbf16, #tpu.memory_space<vmem>>, %arg19: memref<1x32xf32, #tpu.memory_space<vmem>>, %arg20: memref<1x1x32xf32, #tpu.memory_space<vmem>>) attributes {dimension_semantics = [#tpu.dimension_semantics<parallel>], iteration_bounds = array<i64: 2>, scalar_prefetch = 0 : i64, scratch_operands = 0 : i64, tpu.core_type = #tpu.core_type<tc>, window_params = [{transform_indices = @transform_0, window_bounds = array<i64: 1, 8, 16>}, {pipeline_mode = #tpu.pipeline_mode<synchronous>, transform_indices = @transform_1, window_bounds = array<i64: 16, 32>}, {pipeline_mode = #tpu.pipeline_mode<synchronous>, transform_indices = @transform_2, window_bounds = array<i64: 1, 32>}, {pipeline_mode = #tpu.pipeline_mode<synchronous>, transform_indices = @transform_3, window_bounds = array<i64: 32, 32>}, {pipeline_mode = #tpu.pipeline_mode<synchronous>, transform_indices = @transform_4, window_bounds = array<i64: 1, 32>}, {pipeline_mode = #tpu.pipeline_mode<synchronous>, transform_indices = @transform_5, window_bounds = array<i64: 5, 32, 32>}, {pipeline_mode = #tpu.pipeline_mode<synchronous>, transform_indices = @transform_6, window_bounds = array<i64: 5, 32, 32>}, {pipeline_mode = #tpu.pipeline_mode<synchronous>, transform_indices = @transform_7, window_bounds = array<i64: 1, 32>}, {pipeline_mode = #tpu.pipeline_mode<synchronous>, transform_indices = @transform_8, window_bounds = array<i64: 1, 32>}, {pipeline_mode = #tpu.pipeline_mode<synchronous>, transform_indices = @transform_9, window_bounds = array<i64: 5, 32, 32>}, {pipeline_mode = #tpu.pipeline_mode<synchronous>, transform_indices = @transform_10, window_bounds = array<i64: 5, 32, 32>}, {pipeline_mode = #tpu.pipeline_mode<synchronous>, transform_indices = @transform_11, window_bounds = array<i64: 1, 32>}, {pipeline_mode = #tpu.pipeline_mode<synchronous>, transform_indices = @transform_12, window_bounds = array<i64: 1, 32>}, {pipeline_mode = #tpu.pipeline_mode<synchronous>, transform_indices = @transform_13, window_bounds = array<i64: 32, 96>}, {pipeline_mode = #tpu.pipeline_mode<synchronous>, transform_indices = @transform_14, window_bounds = array<i64: 1, 96>}, {pipeline_mode = #tpu.pipeline_mode<synchronous>, transform_indices = @transform_15, window_bounds = array<i64: 32, 32>}, {pipeline_mode = #tpu.pipeline_mode<synchronous>, transform_indices = @transform_16, window_bounds = array<i64: 1, 32>}, {pipeline_mode = #tpu.pipeline_mode<synchronous>, transform_indices = @transform_17, window_bounds = array<i64: 32, 32>}, {pipeline_mode = #tpu.pipeline_mode<synchronous>, transform_indices = @transform_18, window_bounds = array<i64: 1, 32>}, {transform_indices = @transform_19, window_bounds = array<i64: 1, 1, 32>}]} {
    %c0 = arith.constant 0 : index
    %c0_0 = arith.constant 0 : index
    %c0_1 = arith.constant 0 : index
    %0 = vector.load %arg1[%c0, %c0_0, %c0_1] : memref<1x8x16xf32, #tpu.memory_space<vmem>>, vector<1x8x16xf32>
    %1 = vector.shape_cast %0 : vector<1x8x16xf32> to vector<8x16xf32>
    %c0_2 = arith.constant 0 : index
    %c0_3 = arith.constant 0 : index
    %2 = vector.load %arg2[%c0_2, %c0_3] : memref<16x32xbf16, #tpu.memory_space<vmem>>, vector<16x32xbf16>
    %3 = arith.truncf %1 : vector<8x16xf32> to vector<8x16xbf16>
    %cst = arith.constant dense<0.000000e+00> : vector<8x32xf32>
    %4 = tpu.matmul %3, %2, %cst {dimension_numbers = #tpu.dot_dimension_numbers<[1], [0], [0], [1], [0, 0, 1, 1], [], []>} : vector<8x16xbf16>, vector<16x32xbf16>, vector<8x32xf32> -> vector<8x32xf32>
    %c0_4 = arith.constant 0 : index
    %c0_5 = arith.constant 0 : index
    %5 = vector.load %arg3[%c0_4, %c0_5] : memref<1x32xf32, #tpu.memory_space<vmem>>, vector<1x32xf32>
    %6 = vector.broadcast %5 : vector<1x32xf32> to vector<8x32xf32>
    %7 = arith.addf %4, %6 : vector<8x32xf32>
    %cst_6 = arith.constant 0.000000e+00 : f32
    %8 = vector.broadcast %cst_6 : f32 to vector<8x32xf32>
    %9 = arith.maximumf %7, %8 : vector<8x32xf32>
    %10 = math.absf %7 : vector<8x32xf32>
    %cst_7 = arith.constant 0.000000e+00 : f32
    %11 = vector.broadcast %cst_7 : f32 to vector<8x32xf32>
    %12 = arith.subf %11, %10 : vector<8x32xf32>
    %13 = math.exp %12 : vector<8x32xf32>
    %14 = math.log1p %13 : vector<8x32xf32>
    %15 = arith.addf %9, %14 : vector<8x32xf32>
    %16 = math.tanh %15 : vector<8x32xf32>
    %17 = arith.mulf %7, %16 : vector<8x32xf32>
    %c0_8 = arith.constant 0 : index
    %c0_9 = arith.constant 0 : index
    %18 = vector.load %arg4[%c0_8, %c0_9] : memref<32x32xbf16, #tpu.memory_space<vmem>>, vector<32x32xbf16>
    %19 = arith.truncf %17 : vector<8x32xf32> to vector<8x32xbf16>
    %cst_10 = arith.constant dense<0.000000e+00> : vector<8x32xf32>
    %20 = tpu.matmul %19, %18, %cst_10 {dimension_numbers = #tpu.dot_dimension_numbers<[1], [0], [0], [1], [0, 0, 1, 1], [], []>} : vector<8x32xbf16>, vector<32x32xbf16>, vector<8x32xf32> -> vector<8x32xf32>
    %c0_11 = arith.constant 0 : index
    %c0_12 = arith.constant 0 : index
    %21 = vector.load %arg5[%c0_11, %c0_12] : memref<1x32xf32, #tpu.memory_space<vmem>>, vector<1x32xf32>
    %22 = vector.broadcast %21 : vector<1x32xf32> to vector<8x32xf32>
    %23 = arith.addf %20, %22 : vector<8x32xf32>
    %cst_13 = arith.constant 0.000000e+00 : f32
    %24 = vector.broadcast %cst_13 : f32 to vector<8x32xf32>
    %25 = arith.maximumf %23, %24 : vector<8x32xf32>
    %26 = math.absf %23 : vector<8x32xf32>
    %cst_14 = arith.constant 0.000000e+00 : f32
    %27 = vector.broadcast %cst_14 : f32 to vector<8x32xf32>
    %28 = arith.subf %27, %26 : vector<8x32xf32>
    %29 = math.exp %28 : vector<8x32xf32>
    %30 = math.log1p %29 : vector<8x32xf32>
    %31 = arith.addf %25, %30 : vector<8x32xf32>
    %32 = math.tanh %31 : vector<8x32xf32>
    %33 = arith.mulf %23, %32 : vector<8x32xf32>
    %34 = tpu.iota {dimensions = array<i32: 0>} : vector<8x32xi32>
    %cst_15 = arith.constant 0.000000e+00 : f32
    %35 = vector.broadcast %cst_15 : f32 to vector<8x32xf32>
    %cst_16 = arith.constant 0.000000e+00 : f32
    %36 = vector.broadcast %cst_16 : f32 to vector<8x32xf32>
    %c2_i32 = arith.constant 2 : i32
    %37 = tpu.dynamic_rotate %33 by %c2_i32 dim 0 : vector<8x32xf32>, i32 -> vector<8x32xf32>
    %c2_i32_17 = arith.constant 2 : i32
    %38 = vector.broadcast %c2_i32_17 : i32 to vector<8x32xi32>
    %39 = arith.cmpi sge, %34, %38 : vector<8x32xi32>
    %cst_18 = arith.constant 0.000000e+00 : f32
    %40 = vector.broadcast %cst_18 : f32 to vector<8x32xf32>
    %41 = arith.select %39, %37, %40 : vector<8x32xi1>, vector<8x32xf32>
    %42 = arith.truncf %41 : vector<8x32xf32> to vector<8x32xbf16>
    %c0_19 = arith.constant 0 : index
    %c0_20 = arith.constant 0 : index
    %c0_21 = arith.constant 0 : index
    %43 = vector.load %arg6[%c0_19, %c0_20, %c0_21] : memref<5x32x32xbf16, #tpu.memory_space<vmem>>, vector<1x32x32xbf16>
    %44 = vector.shape_cast %43 : vector<1x32x32xbf16> to vector<32x32xbf16>
    %cst_22 = arith.constant dense<0.000000e+00> : vector<8x32xf32>
    %45 = tpu.matmul %42, %44, %cst_22 {dimension_numbers = #tpu.dot_dimension_numbers<[1], [0], [0], [1], [0, 0, 1, 1], [], []>} : vector<8x32xbf16>, vector<32x32xbf16>, vector<8x32xf32> -> vector<8x32xf32>
    %46 = arith.addf %35, %45 : vector<8x32xf32>
    %c0_23 = arith.constant 0 : index
    %c0_24 = arith.constant 0 : index
    %c0_25 = arith.constant 0 : index
    %47 = vector.load %arg7[%c0_23, %c0_24, %c0_25] : memref<5x32x32xbf16, #tpu.memory_space<vmem>>, vector<1x32x32xbf16>
    %48 = vector.shape_cast %47 : vector<1x32x32xbf16> to vector<32x32xbf16>
    %cst_26 = arith.constant dense<0.000000e+00> : vector<8x32xf32>
    %49 = tpu.matmul %42, %48, %cst_26 {dimension_numbers = #tpu.dot_dimension_numbers<[1], [0], [0], [1], [0, 0, 1, 1], [], []>} : vector<8x32xbf16>, vector<32x32xbf16>, vector<8x32xf32> -> vector<8x32xf32>
    %50 = arith.addf %36, %49 : vector<8x32xf32>
    %c1_i32 = arith.constant 1 : i32
    %51 = tpu.dynamic_rotate %33 by %c1_i32 dim 0 : vector<8x32xf32>, i32 -> vector<8x32xf32>
    %c1_i32_27 = arith.constant 1 : i32
    %52 = vector.broadcast %c1_i32_27 : i32 to vector<8x32xi32>
    %53 = arith.cmpi sge, %34, %52 : vector<8x32xi32>
    %cst_28 = arith.constant 0.000000e+00 : f32
    %54 = vector.broadcast %cst_28 : f32 to vector<8x32xf32>
    %55 = arith.select %53, %51, %54 : vector<8x32xi1>, vector<8x32xf32>
    %56 = arith.truncf %55 : vector<8x32xf32> to vector<8x32xbf16>
    %c1 = arith.constant 1 : index
    %c0_29 = arith.constant 0 : index
    %c0_30 = arith.constant 0 : index
    %57 = vector.load %arg6[%c1, %c0_29, %c0_30] : memref<5x32x32xbf16, #tpu.memory_space<vmem>>, vector<1x32x32xbf16>
    %58 = vector.shape_cast %57 : vector<1x32x32xbf16> to vector<32x32xbf16>
    %cst_31 = arith.constant dense<0.000000e+00> : vector<8x32xf32>
    %59 = tpu.matmul %56, %58, %cst_31 {dimension_numbers = #tpu.dot_dimension_numbers<[1], [0], [0], [1], [0, 0, 1, 1], [], []>} : vector<8x32xbf16>, vector<32x32xbf16>, vector<8x32xf32> -> vector<8x32xf32>
    %60 = arith.addf %46, %59 : vector<8x32xf32>
    %c1_32 = arith.constant 1 : index
    %c0_33 = arith.constant 0 : index
    %c0_34 = arith.constant 0 : index
    %61 = vector.load %arg7[%c1_32, %c0_33, %c0_34] : memref<5x32x32xbf16, #tpu.memory_space<vmem>>, vector<1x32x32xbf16>
    %62 = vector.shape_cast %61 : vector<1x32x32xbf16> to vector<32x32xbf16>
    %cst_35 = arith.constant dense<0.000000e+00> : vector<8x32xf32>
    %63 = tpu.matmul %56, %62, %cst_35 {dimension_numbers = #tpu.dot_dimension_numbers<[1], [0], [0], [1], [0, 0, 1, 1], [], []>} : vector<8x32xbf16>, vector<32x32xbf16>, vector<8x32xf32> -> vector<8x32xf32>
    %64 = arith.addf %50, %63 : vector<8x32xf32>
    %65 = arith.truncf %33 : vector<8x32xf32> to vector<8x32xbf16>
    %c2 = arith.constant 2 : index
    %c0_36 = arith.constant 0 : index
    %c0_37 = arith.constant 0 : index
    %66 = vector.load %arg6[%c2, %c0_36, %c0_37] : memref<5x32x32xbf16, #tpu.memory_space<vmem>>, vector<1x32x32xbf16>
    %67 = vector.shape_cast %66 : vector<1x32x32xbf16> to vector<32x32xbf16>
    %cst_38 = arith.constant dense<0.000000e+00> : vector<8x32xf32>
    %68 = tpu.matmul %65, %67, %cst_38 {dimension_numbers = #tpu.dot_dimension_numbers<[1], [0], [0], [1], [0, 0, 1, 1], [], []>} : vector<8x32xbf16>, vector<32x32xbf16>, vector<8x32xf32> -> vector<8x32xf32>
    %69 = arith.addf %60, %68 : vector<8x32xf32>
    %c2_39 = arith.constant 2 : index
    %c0_40 = arith.constant 0 : index
    %c0_41 = arith.constant 0 : index
    %70 = vector.load %arg7[%c2_39, %c0_40, %c0_41] : memref<5x32x32xbf16, #tpu.memory_space<vmem>>, vector<1x32x32xbf16>
    %71 = vector.shape_cast %70 : vector<1x32x32xbf16> to vector<32x32xbf16>
    %cst_42 = arith.constant dense<0.000000e+00> : vector<8x32xf32>
    %72 = tpu.matmul %65, %71, %cst_42 {dimension_numbers = #tpu.dot_dimension_numbers<[1], [0], [0], [1], [0, 0, 1, 1], [], []>} : vector<8x32xbf16>, vector<32x32xbf16>, vector<8x32xf32> -> vector<8x32xf32>
    %73 = arith.addf %64, %72 : vector<8x32xf32>
    %c7_i32 = arith.constant 7 : i32
    %74 = tpu.dynamic_rotate %33 by %c7_i32 dim 0 : vector<8x32xf32>, i32 -> vector<8x32xf32>
    %c7_i32_43 = arith.constant 7 : i32
    %75 = vector.broadcast %c7_i32_43 : i32 to vector<8x32xi32>
    %76 = arith.cmpi slt, %34, %75 : vector<8x32xi32>
    %cst_44 = arith.constant 0.000000e+00 : f32
    %77 = vector.broadcast %cst_44 : f32 to vector<8x32xf32>
    %78 = arith.select %76, %74, %77 : vector<8x32xi1>, vector<8x32xf32>
    %79 = arith.truncf %78 : vector<8x32xf32> to vector<8x32xbf16>
    %c3 = arith.constant 3 : index
    %c0_45 = arith.constant 0 : index
    %c0_46 = arith.constant 0 : index
    %80 = vector.load %arg6[%c3, %c0_45, %c0_46] : memref<5x32x32xbf16, #tpu.memory_space<vmem>>, vector<1x32x32xbf16>
    %81 = vector.shape_cast %80 : vector<1x32x32xbf16> to vector<32x32xbf16>
    %cst_47 = arith.constant dense<0.000000e+00> : vector<8x32xf32>
    %82 = tpu.matmul %79, %81, %cst_47 {dimension_numbers = #tpu.dot_dimension_numbers<[1], [0], [0], [1], [0, 0, 1, 1], [], []>} : vector<8x32xbf16>, vector<32x32xbf16>, vector<8x32xf32> -> vector<8x32xf32>
    %83 = arith.addf %69, %82 : vector<8x32xf32>
    %c3_48 = arith.constant 3 : index
    %c0_49 = arith.constant 0 : index
    %c0_50 = arith.constant 0 : index
    %84 = vector.load %arg7[%c3_48, %c0_49, %c0_50] : memref<5x32x32xbf16, #tpu.memory_space<vmem>>, vector<1x32x32xbf16>
    %85 = vector.shape_cast %84 : vector<1x32x32xbf16> to vector<32x32xbf16>
    %cst_51 = arith.constant dense<0.000000e+00> : vector<8x32xf32>
    %86 = tpu.matmul %79, %85, %cst_51 {dimension_numbers = #tpu.dot_dimension_numbers<[1], [0], [0], [1], [0, 0, 1, 1], [], []>} : vector<8x32xbf16>, vector<32x32xbf16>, vector<8x32xf32> -> vector<8x32xf32>
    %87 = arith.addf %73, %86 : vector<8x32xf32>
    %c6_i32 = arith.constant 6 : i32
    %88 = tpu.dynamic_rotate %33 by %c6_i32 dim 0 : vector<8x32xf32>, i32 -> vector<8x32xf32>
    %c6_i32_52 = arith.constant 6 : i32
    %89 = vector.broadcast %c6_i32_52 : i32 to vector<8x32xi32>
    %90 = arith.cmpi slt, %34, %89 : vector<8x32xi32>
    %cst_53 = arith.constant 0.000000e+00 : f32
    %91 = vector.broadcast %cst_53 : f32 to vector<8x32xf32>
    %92 = arith.select %90, %88, %91 : vector<8x32xi1>, vector<8x32xf32>
    %93 = arith.truncf %92 : vector<8x32xf32> to vector<8x32xbf16>
    %c4 = arith.constant 4 : index
    %c0_54 = arith.constant 0 : index
    %c0_55 = arith.constant 0 : index
    %94 = vector.load %arg6[%c4, %c0_54, %c0_55] : memref<5x32x32xbf16, #tpu.memory_space<vmem>>, vector<1x32x32xbf16>
    %95 = vector.shape_cast %94 : vector<1x32x32xbf16> to vector<32x32xbf16>
    %cst_56 = arith.constant dense<0.000000e+00> : vector<8x32xf32>
    %96 = tpu.matmul %93, %95, %cst_56 {dimension_numbers = #tpu.dot_dimension_numbers<[1], [0], [0], [1], [0, 0, 1, 1], [], []>} : vector<8x32xbf16>, vector<32x32xbf16>, vector<8x32xf32> -> vector<8x32xf32>
    %97 = arith.addf %83, %96 : vector<8x32xf32>
    %c4_57 = arith.constant 4 : index
    %c0_58 = arith.constant 0 : index
    %c0_59 = arith.constant 0 : index
    %98 = vector.load %arg7[%c4_57, %c0_58, %c0_59] : memref<5x32x32xbf16, #tpu.memory_space<vmem>>, vector<1x32x32xbf16>
    %99 = vector.shape_cast %98 : vector<1x32x32xbf16> to vector<32x32xbf16>
    %cst_60 = arith.constant dense<0.000000e+00> : vector<8x32xf32>
    %100 = tpu.matmul %93, %99, %cst_60 {dimension_numbers = #tpu.dot_dimension_numbers<[1], [0], [0], [1], [0, 0, 1, 1], [], []>} : vector<8x32xbf16>, vector<32x32xbf16>, vector<8x32xf32> -> vector<8x32xf32>
    %101 = arith.addf %87, %100 : vector<8x32xf32>
    %c0_61 = arith.constant 0 : index
    %c0_62 = arith.constant 0 : index
    %102 = vector.load %arg8[%c0_61, %c0_62] : memref<1x32xf32, #tpu.memory_space<vmem>>, vector<1x32xf32>
    %103 = vector.broadcast %102 : vector<1x32xf32> to vector<8x32xf32>
    %104 = arith.addf %97, %103 : vector<8x32xf32>
    %c0_63 = arith.constant 0 : index
    %c0_64 = arith.constant 0 : index
    %105 = vector.load %arg9[%c0_63, %c0_64] : memref<1x32xf32, #tpu.memory_space<vmem>>, vector<1x32xf32>
    %106 = vector.broadcast %105 : vector<1x32xf32> to vector<8x32xf32>
    %107 = arith.addf %101, %106 : vector<8x32xf32>
    %cst_65 = arith.constant 5.000000e-01 : f32
    %108 = vector.broadcast %cst_65 : f32 to vector<8x32xf32>
    %109 = arith.mulf %108, %107 : vector<8x32xf32>
    %110 = math.tanh %109 : vector<8x32xf32>
    %cst_66 = arith.constant 1.000000e+00 : f32
    %111 = vector.broadcast %cst_66 : f32 to vector<8x32xf32>
    %112 = arith.addf %110, %111 : vector<8x32xf32>
    %cst_67 = arith.constant 5.000000e-01 : f32
    %113 = vector.broadcast %cst_67 : f32 to vector<8x32xf32>
    %114 = arith.mulf %113, %112 : vector<8x32xf32>
    %115 = arith.mulf %104, %114 : vector<8x32xf32>
    %116 = arith.addf %33, %115 : vector<8x32xf32>
    %cst_68 = arith.constant 0.000000e+00 : f32
    %117 = vector.broadcast %cst_68 : f32 to vector<8x32xf32>
    %cst_69 = arith.constant 0.000000e+00 : f32
    %118 = vector.broadcast %cst_69 : f32 to vector<8x32xf32>
    %c2_i32_70 = arith.constant 2 : i32
    %119 = tpu.dynamic_rotate %116 by %c2_i32_70 dim 0 : vector<8x32xf32>, i32 -> vector<8x32xf32>
    %c2_i32_71 = arith.constant 2 : i32
    %120 = vector.broadcast %c2_i32_71 : i32 to vector<8x32xi32>
    %121 = arith.cmpi sge, %34, %120 : vector<8x32xi32>
    %cst_72 = arith.constant 0.000000e+00 : f32
    %122 = vector.broadcast %cst_72 : f32 to vector<8x32xf32>
    %123 = arith.select %121, %119, %122 : vector<8x32xi1>, vector<8x32xf32>
    %124 = arith.truncf %123 : vector<8x32xf32> to vector<8x32xbf16>
    %c0_73 = arith.constant 0 : index
    %c0_74 = arith.constant 0 : index
    %c0_75 = arith.constant 0 : index
    %125 = vector.load %arg10[%c0_73, %c0_74, %c0_75] : memref<5x32x32xbf16, #tpu.memory_space<vmem>>, vector<1x32x32xbf16>
    %126 = vector.shape_cast %125 : vector<1x32x32xbf16> to vector<32x32xbf16>
    %cst_76 = arith.constant dense<0.000000e+00> : vector<8x32xf32>
    %127 = tpu.matmul %124, %126, %cst_76 {dimension_numbers = #tpu.dot_dimension_numbers<[1], [0], [0], [1], [0, 0, 1, 1], [], []>} : vector<8x32xbf16>, vector<32x32xbf16>, vector<8x32xf32> -> vector<8x32xf32>
    %128 = arith.addf %117, %127 : vector<8x32xf32>
    %c0_77 = arith.constant 0 : index
    %c0_78 = arith.constant 0 : index
    %c0_79 = arith.constant 0 : index
    %129 = vector.load %arg11[%c0_77, %c0_78, %c0_79] : memref<5x32x32xbf16, #tpu.memory_space<vmem>>, vector<1x32x32xbf16>
    %130 = vector.shape_cast %129 : vector<1x32x32xbf16> to vector<32x32xbf16>
    %cst_80 = arith.constant dense<0.000000e+00> : vector<8x32xf32>
    %131 = tpu.matmul %124, %130, %cst_80 {dimension_numbers = #tpu.dot_dimension_numbers<[1], [0], [0], [1], [0, 0, 1, 1], [], []>} : vector<8x32xbf16>, vector<32x32xbf16>, vector<8x32xf32> -> vector<8x32xf32>
    %132 = arith.addf %118, %131 : vector<8x32xf32>
    %c1_i32_81 = arith.constant 1 : i32
    %133 = tpu.dynamic_rotate %116 by %c1_i32_81 dim 0 : vector<8x32xf32>, i32 -> vector<8x32xf32>
    %c1_i32_82 = arith.constant 1 : i32
    %134 = vector.broadcast %c1_i32_82 : i32 to vector<8x32xi32>
    %135 = arith.cmpi sge, %34, %134 : vector<8x32xi32>
    %cst_83 = arith.constant 0.000000e+00 : f32
    %136 = vector.broadcast %cst_83 : f32 to vector<8x32xf32>
    %137 = arith.select %135, %133, %136 : vector<8x32xi1>, vector<8x32xf32>
    %138 = arith.truncf %137 : vector<8x32xf32> to vector<8x32xbf16>
    %c1_84 = arith.constant 1 : index
    %c0_85 = arith.constant 0 : index
    %c0_86 = arith.constant 0 : index
    %139 = vector.load %arg10[%c1_84, %c0_85, %c0_86] : memref<5x32x32xbf16, #tpu.memory_space<vmem>>, vector<1x32x32xbf16>
    %140 = vector.shape_cast %139 : vector<1x32x32xbf16> to vector<32x32xbf16>
    %cst_87 = arith.constant dense<0.000000e+00> : vector<8x32xf32>
    %141 = tpu.matmul %138, %140, %cst_87 {dimension_numbers = #tpu.dot_dimension_numbers<[1], [0], [0], [1], [0, 0, 1, 1], [], []>} : vector<8x32xbf16>, vector<32x32xbf16>, vector<8x32xf32> -> vector<8x32xf32>
    %142 = arith.addf %128, %141 : vector<8x32xf32>
    %c1_88 = arith.constant 1 : index
    %c0_89 = arith.constant 0 : index
    %c0_90 = arith.constant 0 : index
    %143 = vector.load %arg11[%c1_88, %c0_89, %c0_90] : memref<5x32x32xbf16, #tpu.memory_space<vmem>>, vector<1x32x32xbf16>
    %144 = vector.shape_cast %143 : vector<1x32x32xbf16> to vector<32x32xbf16>
    %cst_91 = arith.constant dense<0.000000e+00> : vector<8x32xf32>
    %145 = tpu.matmul %138, %144, %cst_91 {dimension_numbers = #tpu.dot_dimension_numbers<[1], [0], [0], [1], [0, 0, 1, 1], [], []>} : vector<8x32xbf16>, vector<32x32xbf16>, vector<8x32xf32> -> vector<8x32xf32>
    %146 = arith.addf %132, %145 : vector<8x32xf32>
    %147 = arith.truncf %116 : vector<8x32xf32> to vector<8x32xbf16>
    %c2_92 = arith.constant 2 : index
    %c0_93 = arith.constant 0 : index
    %c0_94 = arith.constant 0 : index
    %148 = vector.load %arg10[%c2_92, %c0_93, %c0_94] : memref<5x32x32xbf16, #tpu.memory_space<vmem>>, vector<1x32x32xbf16>
    %149 = vector.shape_cast %148 : vector<1x32x32xbf16> to vector<32x32xbf16>
    %cst_95 = arith.constant dense<0.000000e+00> : vector<8x32xf32>
    %150 = tpu.matmul %147, %149, %cst_95 {dimension_numbers = #tpu.dot_dimension_numbers<[1], [0], [0], [1], [0, 0, 1, 1], [], []>} : vector<8x32xbf16>, vector<32x32xbf16>, vector<8x32xf32> -> vector<8x32xf32>
    %151 = arith.addf %142, %150 : vector<8x32xf32>
    %c2_96 = arith.constant 2 : index
    %c0_97 = arith.constant 0 : index
    %c0_98 = arith.constant 0 : index
    %152 = vector.load %arg11[%c2_96, %c0_97, %c0_98] : memref<5x32x32xbf16, #tpu.memory_space<vmem>>, vector<1x32x32xbf16>
    %153 = vector.shape_cast %152 : vector<1x32x32xbf16> to vector<32x32xbf16>
    %cst_99 = arith.constant dense<0.000000e+00> : vector<8x32xf32>
    %154 = tpu.matmul %147, %153, %cst_99 {dimension_numbers = #tpu.dot_dimension_numbers<[1], [0], [0], [1], [0, 0, 1, 1], [], []>} : vector<8x32xbf16>, vector<32x32xbf16>, vector<8x32xf32> -> vector<8x32xf32>
    %155 = arith.addf %146, %154 : vector<8x32xf32>
    %c7_i32_100 = arith.constant 7 : i32
    %156 = tpu.dynamic_rotate %116 by %c7_i32_100 dim 0 : vector<8x32xf32>, i32 -> vector<8x32xf32>
    %c7_i32_101 = arith.constant 7 : i32
    %157 = vector.broadcast %c7_i32_101 : i32 to vector<8x32xi32>
    %158 = arith.cmpi slt, %34, %157 : vector<8x32xi32>
    %cst_102 = arith.constant 0.000000e+00 : f32
    %159 = vector.broadcast %cst_102 : f32 to vector<8x32xf32>
    %160 = arith.select %158, %156, %159 : vector<8x32xi1>, vector<8x32xf32>
    %161 = arith.truncf %160 : vector<8x32xf32> to vector<8x32xbf16>
    %c3_103 = arith.constant 3 : index
    %c0_104 = arith.constant 0 : index
    %c0_105 = arith.constant 0 : index
    %162 = vector.load %arg10[%c3_103, %c0_104, %c0_105] : memref<5x32x32xbf16, #tpu.memory_space<vmem>>, vector<1x32x32xbf16>
    %163 = vector.shape_cast %162 : vector<1x32x32xbf16> to vector<32x32xbf16>
    %cst_106 = arith.constant dense<0.000000e+00> : vector<8x32xf32>
    %164 = tpu.matmul %161, %163, %cst_106 {dimension_numbers = #tpu.dot_dimension_numbers<[1], [0], [0], [1], [0, 0, 1, 1], [], []>} : vector<8x32xbf16>, vector<32x32xbf16>, vector<8x32xf32> -> vector<8x32xf32>
    %165 = arith.addf %151, %164 : vector<8x32xf32>
    %c3_107 = arith.constant 3 : index
    %c0_108 = arith.constant 0 : index
    %c0_109 = arith.constant 0 : index
    %166 = vector.load %arg11[%c3_107, %c0_108, %c0_109] : memref<5x32x32xbf16, #tpu.memory_space<vmem>>, vector<1x32x32xbf16>
    %167 = vector.shape_cast %166 : vector<1x32x32xbf16> to vector<32x32xbf16>
    %cst_110 = arith.constant dense<0.000000e+00> : vector<8x32xf32>
    %168 = tpu.matmul %161, %167, %cst_110 {dimension_numbers = #tpu.dot_dimension_numbers<[1], [0], [0], [1], [0, 0, 1, 1], [], []>} : vector<8x32xbf16>, vector<32x32xbf16>, vector<8x32xf32> -> vector<8x32xf32>
    %169 = arith.addf %155, %168 : vector<8x32xf32>
    %c6_i32_111 = arith.constant 6 : i32
    %170 = tpu.dynamic_rotate %116 by %c6_i32_111 dim 0 : vector<8x32xf32>, i32 -> vector<8x32xf32>
    %c6_i32_112 = arith.constant 6 : i32
    %171 = vector.broadcast %c6_i32_112 : i32 to vector<8x32xi32>
    %172 = arith.cmpi slt, %34, %171 : vector<8x32xi32>
    %cst_113 = arith.constant 0.000000e+00 : f32
    %173 = vector.broadcast %cst_113 : f32 to vector<8x32xf32>
    %174 = arith.select %172, %170, %173 : vector<8x32xi1>, vector<8x32xf32>
    %175 = arith.truncf %174 : vector<8x32xf32> to vector<8x32xbf16>
    %c4_114 = arith.constant 4 : index
    %c0_115 = arith.constant 0 : index
    %c0_116 = arith.constant 0 : index
    %176 = vector.load %arg10[%c4_114, %c0_115, %c0_116] : memref<5x32x32xbf16, #tpu.memory_space<vmem>>, vector<1x32x32xbf16>
    %177 = vector.shape_cast %176 : vector<1x32x32xbf16> to vector<32x32xbf16>
    %cst_117 = arith.constant dense<0.000000e+00> : vector<8x32xf32>
    %178 = tpu.matmul %175, %177, %cst_117 {dimension_numbers = #tpu.dot_dimension_numbers<[1], [0], [0], [1], [0, 0, 1, 1], [], []>} : vector<8x32xbf16>, vector<32x32xbf16>, vector<8x32xf32> -> vector<8x32xf32>
    %179 = arith.addf %165, %178 : vector<8x32xf32>
    %c4_118 = arith.constant 4 : index
    %c0_119 = arith.constant 0 : index
    %c0_120 = arith.constant 0 : index
    %180 = vector.load %arg11[%c4_118, %c0_119, %c0_120] : memref<5x32x32xbf16, #tpu.memory_space<vmem>>, vector<1x32x32xbf16>
    %181 = vector.shape_cast %180 : vector<1x32x32xbf16> to vector<32x32xbf16>
    %cst_121 = arith.constant dense<0.000000e+00> : vector<8x32xf32>
    %182 = tpu.matmul %175, %181, %cst_121 {dimension_numbers = #tpu.dot_dimension_numbers<[1], [0], [0], [1], [0, 0, 1, 1], [], []>} : vector<8x32xbf16>, vector<32x32xbf16>, vector<8x32xf32> -> vector<8x32xf32>
    %183 = arith.addf %169, %182 : vector<8x32xf32>
    %c0_122 = arith.constant 0 : index
    %c0_123 = arith.constant 0 : index
    %184 = vector.load %arg12[%c0_122, %c0_123] : memref<1x32xf32, #tpu.memory_space<vmem>>, vector<1x32xf32>
    %185 = vector.broadcast %184 : vector<1x32xf32> to vector<8x32xf32>
    %186 = arith.addf %179, %185 : vector<8x32xf32>
    %c0_124 = arith.constant 0 : index
    %c0_125 = arith.constant 0 : index
    %187 = vector.load %arg13[%c0_124, %c0_125] : memref<1x32xf32, #tpu.memory_space<vmem>>, vector<1x32xf32>
    %188 = vector.broadcast %187 : vector<1x32xf32> to vector<8x32xf32>
    %189 = arith.addf %183, %188 : vector<8x32xf32>
    %cst_126 = arith.constant 5.000000e-01 : f32
    %190 = vector.broadcast %cst_126 : f32 to vector<8x32xf32>
    %191 = arith.mulf %190, %189 : vector<8x32xf32>
    %192 = math.tanh %191 : vector<8x32xf32>
    %cst_127 = arith.constant 1.000000e+00 : f32
    %193 = vector.broadcast %cst_127 : f32 to vector<8x32xf32>
    %194 = arith.addf %192, %193 : vector<8x32xf32>
    %cst_128 = arith.constant 5.000000e-01 : f32
    %195 = vector.broadcast %cst_128 : f32 to vector<8x32xf32>
    %196 = arith.mulf %195, %194 : vector<8x32xf32>
    %197 = arith.mulf %186, %196 : vector<8x32xf32>
    %198 = arith.addf %116, %197 : vector<8x32xf32>
    %c0_129 = arith.constant 0 : index
    %c0_130 = arith.constant 0 : index
    %199 = vector.load %arg14[%c0_129, %c0_130] : memref<32x96xbf16, #tpu.memory_space<vmem>>, vector<32x96xbf16>
    %200 = arith.truncf %198 : vector<8x32xf32> to vector<8x32xbf16>
    %cst_131 = arith.constant dense<0.000000e+00> : vector<8x96xf32>
    %201 = tpu.matmul %200, %199, %cst_131 {dimension_numbers = #tpu.dot_dimension_numbers<[1], [0], [0], [1], [0, 0, 1, 1], [], []>} : vector<8x32xbf16>, vector<32x96xbf16>, vector<8x96xf32> -> vector<8x96xf32>
    %c0_132 = arith.constant 0 : index
    %c0_133 = arith.constant 0 : index
    %202 = vector.load %arg15[%c0_132, %c0_133] : memref<1x96xf32, #tpu.memory_space<vmem>>, vector<1x96xf32>
    %203 = vector.broadcast %202 : vector<1x96xf32> to vector<8x96xf32>
    %204 = arith.addf %201, %203 : vector<8x96xf32>
    %205 = vector.extract_strided_slice %204 {offsets = [0, 0], sizes = [8, 32], strides = [1, 1]} : vector<8x96xf32> to vector<8x32xf32>
    %cst_134 = arith.constant 0.176776692 : f32
    %206 = vector.broadcast %cst_134 : f32 to vector<8x32xf32>
    %207 = arith.mulf %205, %206 : vector<8x32xf32>
    %208 = vector.extract_strided_slice %204 {offsets = [0, 32], sizes = [8, 32], strides = [1, 1]} : vector<8x96xf32> to vector<8x32xf32>
    %209 = vector.extract_strided_slice %204 {offsets = [0, 64], sizes = [8, 32], strides = [1, 1]} : vector<8x96xf32> to vector<8x32xf32>
    %c0_135 = arith.constant 0 : index
    %c0_136 = arith.constant 0 : index
    %210 = vector.load %arg16[%c0_135, %c0_136] : memref<32x32xbf16, #tpu.memory_space<vmem>>, vector<32x32xbf16>
    %c0_137 = arith.constant 0 : index
    %c0_138 = arith.constant 0 : index
    %211 = vector.load %arg17[%c0_137, %c0_138] : memref<1x32xf32, #tpu.memory_space<vmem>>, vector<1x32xf32>
    %212 = vector.broadcast %211 : vector<1x32xf32> to vector<8x32xf32>
    %213 = arith.addf %198, %212 : vector<8x32xf32>
    %214 = vector.extract_strided_slice %207 {offsets = [0, 0], sizes = [8, 16], strides = [1, 1]} : vector<8x32xf32> to vector<8x16xf32>
    %215 = arith.truncf %214 : vector<8x16xf32> to vector<8x16xbf16>
    %216 = vector.extract_strided_slice %208 {offsets = [0, 0], sizes = [8, 16], strides = [1, 1]} : vector<8x32xf32> to vector<8x16xf32>
    %217 = arith.truncf %216 : vector<8x16xf32> to vector<8x16xbf16>
    %218 = vector.extract_strided_slice %209 {offsets = [0, 0], sizes = [8, 16], strides = [1, 1]} : vector<8x32xf32> to vector<8x16xf32>
    %219 = arith.truncf %218 : vector<8x16xf32> to vector<8x16xbf16>
    %cst_139 = arith.constant dense<0.000000e+00> : vector<8x8xf32>
    %220 = tpu.matmul %215, %217, %cst_139 {dimension_numbers = #tpu.dot_dimension_numbers<[1], [1], [0], [0], [0, 0, 1, 0], [], []>} : vector<8x16xbf16>, vector<8x16xbf16>, vector<8x8xf32> -> vector<8x8xf32>
    %cst_140 = arith.constant dense<0xFF800000> : vector<8xf32>
    %221 = vector.multi_reduction <maximumf>, %220, %cst_140 [1] : vector<8x8xf32> to vector<8xf32>
    %222 = vector.shape_cast %221 : vector<8xf32> to vector<8x1xf32>
    %223 = vector.broadcast %222 : vector<8x1xf32> to vector<8x8xf32>
    %224 = arith.subf %220, %223 : vector<8x8xf32>
    %225 = math.exp %224 : vector<8x8xf32>
    %cst_141 = arith.constant dense<0.000000e+00> : vector<8xf32>
    %226 = vector.multi_reduction <add>, %225, %cst_141 [1] : vector<8x8xf32> to vector<8xf32>
    %227 = vector.shape_cast %226 : vector<8xf32> to vector<8x1xf32>
    %228 = tpu.reciprocal %227 {approx = true} : vector<8x1xf32> -> vector<8x1xf32>
    %229 = vector.broadcast %228 : vector<8x1xf32> to vector<8x8xf32>
    %230 = arith.mulf %225, %229 : vector<8x8xf32>
    %231 = arith.truncf %230 : vector<8x8xf32> to vector<8x8xbf16>
    %cst_142 = arith.constant dense<0.000000e+00> : vector<8x16xf32>
    %232 = tpu.matmul %231, %219, %cst_142 {dimension_numbers = #tpu.dot_dimension_numbers<[1], [0], [0], [1], [0, 0, 1, 1], [], []>} : vector<8x8xbf16>, vector<8x16xbf16>, vector<8x16xf32> -> vector<8x16xf32>
    %233 = arith.truncf %232 : vector<8x16xf32> to vector<8x16xbf16>
    %234 = vector.extract_strided_slice %210 {offsets = [0, 0], sizes = [16, 32], strides = [1, 1]} : vector<32x32xbf16> to vector<16x32xbf16>
    %cst_143 = arith.constant dense<0.000000e+00> : vector<8x32xf32>
    %235 = tpu.matmul %233, %234, %cst_143 {dimension_numbers = #tpu.dot_dimension_numbers<[1], [0], [0], [1], [0, 0, 1, 1], [], []>} : vector<8x16xbf16>, vector<16x32xbf16>, vector<8x32xf32> -> vector<8x32xf32>
    %236 = arith.addf %213, %235 : vector<8x32xf32>
    %237 = vector.extract_strided_slice %207 {offsets = [0, 16], sizes = [8, 16], strides = [1, 1]} : vector<8x32xf32> to vector<8x16xf32>
    %238 = arith.truncf %237 : vector<8x16xf32> to vector<8x16xbf16>
    %239 = vector.extract_strided_slice %208 {offsets = [0, 16], sizes = [8, 16], strides = [1, 1]} : vector<8x32xf32> to vector<8x16xf32>
    %240 = arith.truncf %239 : vector<8x16xf32> to vector<8x16xbf16>
    %241 = vector.extract_strided_slice %209 {offsets = [0, 16], sizes = [8, 16], strides = [1, 1]} : vector<8x32xf32> to vector<8x16xf32>
    %242 = arith.truncf %241 : vector<8x16xf32> to vector<8x16xbf16>
    %cst_144 = arith.constant dense<0.000000e+00> : vector<8x8xf32>
    %243 = tpu.matmul %238, %240, %cst_144 {dimension_numbers = #tpu.dot_dimension_numbers<[1], [1], [0], [0], [0, 0, 1, 0], [], []>} : vector<8x16xbf16>, vector<8x16xbf16>, vector<8x8xf32> -> vector<8x8xf32>
    %cst_145 = arith.constant dense<0xFF800000> : vector<8xf32>
    %244 = vector.multi_reduction <maximumf>, %243, %cst_145 [1] : vector<8x8xf32> to vector<8xf32>
    %245 = vector.shape_cast %244 : vector<8xf32> to vector<8x1xf32>
    %246 = vector.broadcast %245 : vector<8x1xf32> to vector<8x8xf32>
    %247 = arith.subf %243, %246 : vector<8x8xf32>
    %248 = math.exp %247 : vector<8x8xf32>
    %cst_146 = arith.constant dense<0.000000e+00> : vector<8xf32>
    %249 = vector.multi_reduction <add>, %248, %cst_146 [1] : vector<8x8xf32> to vector<8xf32>
    %250 = vector.shape_cast %249 : vector<8xf32> to vector<8x1xf32>
    %251 = tpu.reciprocal %250 {approx = true} : vector<8x1xf32> -> vector<8x1xf32>
    %252 = vector.broadcast %251 : vector<8x1xf32> to vector<8x8xf32>
    %253 = arith.mulf %248, %252 : vector<8x8xf32>
    %254 = arith.truncf %253 : vector<8x8xf32> to vector<8x8xbf16>
    %cst_147 = arith.constant dense<0.000000e+00> : vector<8x16xf32>
    %255 = tpu.matmul %254, %242, %cst_147 {dimension_numbers = #tpu.dot_dimension_numbers<[1], [0], [0], [1], [0, 0, 1, 1], [], []>} : vector<8x8xbf16>, vector<8x16xbf16>, vector<8x16xf32> -> vector<8x16xf32>
    %256 = arith.truncf %255 : vector<8x16xf32> to vector<8x16xbf16>
    %257 = vector.extract_strided_slice %210 {offsets = [16, 0], sizes = [16, 32], strides = [1, 1]} : vector<32x32xbf16> to vector<16x32xbf16>
    %cst_148 = arith.constant dense<0.000000e+00> : vector<8x32xf32>
    %258 = tpu.matmul %256, %257, %cst_148 {dimension_numbers = #tpu.dot_dimension_numbers<[1], [0], [0], [1], [0, 0, 1, 1], [], []>} : vector<8x16xbf16>, vector<16x32xbf16>, vector<8x32xf32> -> vector<8x32xf32>
    %259 = arith.addf %236, %258 : vector<8x32xf32>
    %cst_149 = arith.constant dense<0.000000e+00> : vector<32xf32>
    %260 = vector.multi_reduction <add>, %259, %cst_149 [0] : vector<8x32xf32> to vector<32xf32>
    %261 = vector.shape_cast %260 : vector<32xf32> to vector<1x32xf32>
    %cst_150 = arith.constant 8.000000e+00 : f32
    %262 = vector.broadcast %cst_150 : f32 to vector<1x32xf32>
    %263 = arith.divf %261, %262 : vector<1x32xf32>
    %c0_151 = arith.constant 0 : index
    %c0_152 = arith.constant 0 : index
    %264 = vector.load %arg18[%c0_151, %c0_152] : memref<32x32xbf16, #tpu.memory_space<vmem>>, vector<32x32xbf16>
    %265 = arith.truncf %263 : vector<1x32xf32> to vector<1x32xbf16>
    %cst_153 = arith.constant dense<0.000000e+00> : vector<1x32xf32>
    %266 = tpu.matmul %265, %264, %cst_153 {dimension_numbers = #tpu.dot_dimension_numbers<[1], [0], [0], [1], [0, 0, 1, 1], [], []>} : vector<1x32xbf16>, vector<32x32xbf16>, vector<1x32xf32> -> vector<1x32xf32>
    %c0_154 = arith.constant 0 : index
    %c0_155 = arith.constant 0 : index
    %267 = vector.load %arg19[%c0_154, %c0_155] : memref<1x32xf32, #tpu.memory_space<vmem>>, vector<1x32xf32>
    %268 = arith.addf %266, %267 : vector<1x32xf32>
    %c0_156 = arith.constant 0 : index
    %c0_157 = arith.constant 0 : index
    %c0_158 = arith.constant 0 : index
    %269 = vector.load %arg20[%c0_156, %c0_157, %c0_158] : memref<1x1x32xf32, #tpu.memory_space<vmem>>, vector<1x1x32xf32>
    %270 = vector.shape_cast %269 : vector<1x1x32xf32> to vector<1x32xf32>
    %271 = vector.shape_cast %268 : vector<1x32xf32> to vector<1x1x32xf32>
    tpu.vector_store %arg20[%c0_156, %c0_157, %c0_158], %271 {strides = array<i32>} : memref<1x1x32xf32, #tpu.memory_space<vmem>>, vector<1x1x32xf32>,
    return
  }
  func.func @transform_0(%arg0: i32) -> (i32, i32, i32) {
    %c0_i32 = arith.constant 0 : i32
    %c0_i32_0 = arith.constant 0 : i32
    %c0_i32_1 = arith.constant 0 : i32
    return %arg0, %c0_i32, %c0_i32_0 : i32, i32, i32
  }
  func.func @transform_1(%arg0: i32) -> (i32, i32) {
    %c0_i32 = arith.constant 0 : i32
    %c0_i32_0 = arith.constant 0 : i32
    %c0_i32_1 = arith.constant 0 : i32
    return %c0_i32, %c0_i32_0 : i32, i32
  }
  func.func @transform_2(%arg0: i32) -> (i32, i32) {
    %c0_i32 = arith.constant 0 : i32
    %c0_i32_0 = arith.constant 0 : i32
    %c0_i32_1 = arith.constant 0 : i32
    return %c0_i32, %c0_i32_0 : i32, i32
  }
  func.func @transform_3(%arg0: i32) -> (i32, i32) {
    %c0_i32 = arith.constant 0 : i32
    %c0_i32_0 = arith.constant 0 : i32
    %c0_i32_1 = arith.constant 0 : i32
    return %c0_i32, %c0_i32_0 : i32, i32
  }
  func.func @transform_4(%arg0: i32) -> (i32, i32) {
    %c0_i32 = arith.constant 0 : i32
    %c0_i32_0 = arith.constant 0 : i32
    %c0_i32_1 = arith.constant 0 : i32
    return %c0_i32, %c0_i32_0 : i32, i32
  }
  func.func @transform_5(%arg0: i32) -> (i32, i32, i32) {
    %c0_i32 = arith.constant 0 : i32
    %c0_i32_0 = arith.constant 0 : i32
    %c0_i32_1 = arith.constant 0 : i32
    %c0_i32_2 = arith.constant 0 : i32
    return %c0_i32, %c0_i32_0, %c0_i32_1 : i32, i32, i32
  }
  func.func @transform_6(%arg0: i32) -> (i32, i32, i32) {
    %c0_i32 = arith.constant 0 : i32
    %c0_i32_0 = arith.constant 0 : i32
    %c0_i32_1 = arith.constant 0 : i32
    %c0_i32_2 = arith.constant 0 : i32
    return %c0_i32, %c0_i32_0, %c0_i32_1 : i32, i32, i32
  }
  func.func @transform_7(%arg0: i32) -> (i32, i32) {
    %c0_i32 = arith.constant 0 : i32
    %c0_i32_0 = arith.constant 0 : i32
    %c0_i32_1 = arith.constant 0 : i32
    return %c0_i32, %c0_i32_0 : i32, i32
  }
  func.func @transform_8(%arg0: i32) -> (i32, i32) {
    %c0_i32 = arith.constant 0 : i32
    %c0_i32_0 = arith.constant 0 : i32
    %c0_i32_1 = arith.constant 0 : i32
    return %c0_i32, %c0_i32_0 : i32, i32
  }
  func.func @transform_9(%arg0: i32) -> (i32, i32, i32) {
    %c0_i32 = arith.constant 0 : i32
    %c0_i32_0 = arith.constant 0 : i32
    %c0_i32_1 = arith.constant 0 : i32
    %c0_i32_2 = arith.constant 0 : i32
    return %c0_i32, %c0_i32_0, %c0_i32_1 : i32, i32, i32
  }
  func.func @transform_10(%arg0: i32) -> (i32, i32, i32) {
    %c0_i32 = arith.constant 0 : i32
    %c0_i32_0 = arith.constant 0 : i32
    %c0_i32_1 = arith.constant 0 : i32
    %c0_i32_2 = arith.constant 0 : i32
    return %c0_i32, %c0_i32_0, %c0_i32_1 : i32, i32, i32
  }
  func.func @transform_11(%arg0: i32) -> (i32, i32) {
    %c0_i32 = arith.constant 0 : i32
    %c0_i32_0 = arith.constant 0 : i32
    %c0_i32_1 = arith.constant 0 : i32
    return %c0_i32, %c0_i32_0 : i32, i32
  }
  func.func @transform_12(%arg0: i32) -> (i32, i32) {
    %c0_i32 = arith.constant 0 : i32
    %c0_i32_0 = arith.constant 0 : i32
    %c0_i32_1 = arith.constant 0 : i32
    return %c0_i32, %c0_i32_0 : i32, i32
  }
  func.func @transform_13(%arg0: i32) -> (i32, i32) {
    %c0_i32 = arith.constant 0 : i32
    %c0_i32_0 = arith.constant 0 : i32
    %c0_i32_1 = arith.constant 0 : i32
    return %c0_i32, %c0_i32_0 : i32, i32
  }
  func.func @transform_14(%arg0: i32) -> (i32, i32) {
    %c0_i32 = arith.constant 0 : i32
    %c0_i32_0 = arith.constant 0 : i32
    %c0_i32_1 = arith.constant 0 : i32
    return %c0_i32, %c0_i32_0 : i32, i32
  }
  func.func @transform_15(%arg0: i32) -> (i32, i32) {
    %c0_i32 = arith.constant 0 : i32
    %c0_i32_0 = arith.constant 0 : i32
    %c0_i32_1 = arith.constant 0 : i32
    return %c0_i32, %c0_i32_0 : i32, i32
  }
  func.func @transform_16(%arg0: i32) -> (i32, i32) {
    %c0_i32 = arith.constant 0 : i32
    %c0_i32_0 = arith.constant 0 : i32
    %c0_i32_1 = arith.constant 0 : i32
    return %c0_i32, %c0_i32_0 : i32, i32
  }
  func.func @transform_17(%arg0: i32) -> (i32, i32) {
    %c0_i32 = arith.constant 0 : i32
    %c0_i32_0 = arith.constant 0 : i32
    %c0_i32_1 = arith.constant 0 : i32
    return %c0_i32, %c0_i32_0 : i32, i32
  }
  func.func @transform_18(%arg0: i32) -> (i32, i32) {
    %c0_i32 = arith.constant 0 : i32
    %c0_i32_0 = arith.constant 0 : i32
    %c0_i32_1 = arith.constant 0 : i32
    return %c0_i32, %c0_i32_0 : i32, i32
  }
  func.func @transform_19(%arg0: i32) -> (i32, i32, i32) {
    %c0_i32 = arith.constant 0 : i32
    %c0_i32_0 = arith.constant 0 : i32
    %c0_i32_1 = arith.constant 0 : i32
    return %arg0, %c0_i32, %c0_i32_0 : i32, i32, i32
  }
}

</mosaic_0001>

<llo_original>
// kernel: tpu_custom_call.1
$region0: #{tpu_custom_call.1}
  #allocation0 [shape = 'u32[]', space=smem, size = 0x4, offset = 0x4, fixed_abs, tag = 'smem constant byte address 0x4 - core index']
  #allocation1 [shape = 'u32[72,128]{1,0:T(1,128)}', space=vmem, size = 0x9000, scoped, tag = 'internal scratch']
  %s0 = inlined_call_operand.hbm [shape: f32[2,8,16], index: 0, kind: input, shape index: {}]
  %s1 = inlined_call_operand.hbm [shape: bf16[16,32], index: 1, kind: input, shape index: {}]
  %s2 = inlined_call_operand.hbm [shape: f32[1,32], index: 2, kind: input, shape index: {}]
  %s3 = inlined_call_operand.hbm [shape: bf16[32,32], index: 3, kind: input, shape index: {}]
  %s4 = inlined_call_operand.hbm [shape: f32[1,32], index: 4, kind: input, shape index: {}]
  %s5 = inlined_call_operand.hbm [shape: bf16[5,32,32], index: 5, kind: input, shape index: {}]
  %s6 = inlined_call_operand.hbm [shape: bf16[5,32,32], index: 6, kind: input, shape index: {}]
  %s7 = inlined_call_operand.hbm [shape: f32[1,32], index: 7, kind: input, shape index: {}]
  %s8 = inlined_call_operand.hbm [shape: f32[1,32], index: 8, kind: input, shape index: {}]
  %s9 = inlined_call_operand.hbm [shape: bf16[5,32,32], index: 9, kind: input, shape index: {}]
  %s10 = inlined_call_operand.hbm [shape: bf16[5,32,32], index: 10, kind: input, shape index: {}]
  %s11 = inlined_call_operand.hbm [shape: f32[1,32], index: 11, kind: input, shape index: {}]
  %s12 = inlined_call_operand.hbm [shape: f32[1,32], index: 12, kind: input, shape index: {}]
  %s13 = inlined_call_operand.hbm [shape: bf16[32,96], index: 13, kind: input, shape index: {}]
  %s14 = inlined_call_operand.hbm [shape: f32[1,96], index: 14, kind: input, shape index: {}]
  %s15 = inlined_call_operand.hbm [shape: bf16[32,32], index: 15, kind: input, shape index: {}]
  %s16 = inlined_call_operand.hbm [shape: f32[1,32], index: 16, kind: input, shape index: {}]
  %s17 = inlined_call_operand.vmem [shape: bf16[32,32], index: 17, kind: input, shape index: {}]
  %s18 = inlined_call_operand.vmem [shape: f32[1,32], index: 18, kind: input, shape index: {}]
  %s19 = inlined_call_operand.hbm [shape: f32[2,1,32], index: 19, kind: output, shape index: {}]
  %s20 = sld [smem:[#allocation0]]
  $region177: #{tpu_custom_call.1} parent=0
    _
  %s22 = ssub.s32 1, %s20
  %s23 = scalar_select 0, %s22, %s20
  $region1: #{tpu_custom_call.1} parent=0
    #allocation2 [shape = 'u8[8192]{0}', space=vmem, size = 0x2000, scoped, tag = 'input window, operand 0']
    #allocation3 [shape = 's32[2]{0}', space=sflag, size = 0x8, scoped, tag = 'scoped memory for tpu_custom_call.1']
    #allocation4 [shape = 's32[2]{0}', space=sflag, size = 0x8, scoped, tag = 'scoped memory for tpu_custom_call.1']
    #allocation5 [shape = 'u8[4096]{0}', space=vmem, size = 0x1000, scoped, tag = 'input window, operand 1, single buffered']
    #allocation6 [shape = 's32[1]{0}', space=sflag, size = 0x4, scoped, tag = 'scoped memory for tpu_custom_call.1']
    #allocation7 [shape = 'u8[512]{0}', space=vmem, size = 0x400, scoped, tag = 'input window, operand 2, single buffered']
    #allocation8 [shape = 'u8[8192]{0}', space=vmem, size = 0x2000, scoped, tag = 'input window, operand 3, single buffered']
    #allocation9 [shape = 's32[1]{0}', space=sflag, size = 0x4, scoped, tag = 'scoped memory for tpu_custom_call.1']
    #allocation10 [shape = 'u8[512]{0}', space=vmem, size = 0x400, scoped, tag = 'input window, operand 4, single buffered']
    #allocation11 [shape = 'u8[40960]{0}', space=vmem, size = 0xa000, scoped, tag = 'input window, operand 5, single buffered']
    #allocation12 [shape = 's32[1]{0}', space=sflag, size = 0x4, scoped, tag = 'scoped memory for tpu_custom_call.1']
    #allocation13 [shape = 'u8[40960]{0}', space=vmem, size = 0xa000, scoped, tag = 'input window, operand 6, single buffered']
    #allocation14 [shape = 'u8[512]{0}', space=vmem, size = 0x400, scoped, tag = 'input window, operand 7, single buffered']
    #allocation15 [shape = 's32[1]{0}', space=sflag, size = 0x4, scoped, tag = 'scoped memory for tpu_custom_call.1']
    #allocation16 [shape = 'u8[512]{0}', space=vmem, size = 0x400, scoped, tag = 'input window, operand 8, single buffered']
    #allocation17 [shape = 'u8[40960]{0}', space=vmem, size = 0xa000, scoped, tag = 'input window, operand 9, single buffered']
    #allocation18 [shape = 's32[1]{0}', space=sflag, size = 0x4, scoped, tag = 'scoped memory for tpu_custom_call.1']
    #allocation19 [shape = 'u8[40960]{0}', space=vmem, size = 0xa000, scoped, tag = 'input window, operand 10, single buffered']
    #allocation20 [shape = 'u8[512]{0}', space=vmem, size = 0x400, scoped, tag = 'input window, operand 11, single buffered']
    #allocation21 [shape = 's32[1]{0}', space=sflag, size = 0x4, scoped, tag = 'scoped memory for tpu_custom_call.1']
    #allocation22 [shape = 'u8[512]{0}', space=vmem, size = 0x400, scoped, tag = 'input window, operand 12, single buffered']
    #allocation23 [shape = 'u8[8192]{0}', space=vmem, size = 0x2000, scoped, tag = 'input window, operand 13, single buffered']
    #allocation24 [shape = 's32[1]{0}', space=sflag, size = 0x4, scoped, tag = 'scoped memory for tpu_custom_call.1']
    #allocation25 [shape = 'u8[512]{0}', space=vmem, size = 0x400, scoped, tag = 'input window, operand 14, single buffered']
    #allocation26 [shape = 'u8[8192]{0}', space=vmem, size = 0x2000, scoped, tag = 'input window, operand 15, single buffered']
    #allocation27 [shape = 's32[1]{0}', space=sflag, size = 0x4, scoped, tag = 'scoped memory for tpu_custom_call.1']
    #allocation28 [shape = 'u8[512]{0}', space=vmem, size = 0x400, scoped, tag = 'input window, operand 16, single buffered']
    #allocation29 [shape = 'u8[1024]{0}', space=vmem, size = 0x400, scoped, tag = 'output window, operand 0']
    %24 = vsyncpa [#allocation3], 0
    %s25 = scalar_lea.sflag [#allocation3], 1
    %26 = vsyncpa %s25, 0
    %27 = vsyncpa [#allocation6], 0
    %28 = vsyncpa [#allocation9], 0
    %29 = vsyncpa [#allocation12], 0
    %30 = vsyncpa [#allocation15], 0
    %31 = vsyncpa [#allocation18], 0
    %32 = vsyncpa [#allocation21], 0
    %33 = vsyncpa [#allocation24], 0
    %34 = vsyncpa [#allocation27], 0
    %35 = vsyncpa [#allocation4], 0
    %s36 = scalar_lea.sflag [#allocation4], 1
    %37 = vsyncpa %s36, 0
    loop: start=0, step=1, limit=4
    $region2: #{tpu_custom_call.1} parent=1 // loop_pre_header
      _
    $region3: #{tpu_custom_call.1} parent=1 // loop_header
      %s39 = sphi 0, %s43
      %p40 = scmp.ge.s32.totalorder %s39, 4
      %s49 = sphi 0, %s51
      %s52 = sphi 0, %s49
      %s53 = sphi 0, %s52
      %s69 = sphi 0, %s53
      %s73 = sphi 0, %s73
      %s75 = sphi 0, %s73
      %s76 = sphi 0, %s75
      %s90 = sphi 0, %s76
      %s94 = sphi 0, %s94
      %s96 = sphi 0, %s94
      %s97 = sphi 0, %s96
      %s111 = sphi 0, %s97
      %s115 = sphi 0, %s115
      %s117 = sphi 0, %s115
      %s118 = sphi 0, %s117
      %s132 = sphi 0, %s118
      %s136 = sphi 0, %s136
      %s138 = sphi 0, %s136
      %s139 = sphi 0, %s138
      %s153 = sphi 0, %s139
      %s157 = sphi 0, %s157
      %s159 = sphi 0, %s157
      %s160 = sphi 0, %s159
      %s174 = sphi 0, %s160
      %s178 = sphi 0, %s178
      %s180 = sphi 0, %s178
      %s181 = sphi 0, %s180
      %s195 = sphi 0, %s181
      %s199 = sphi 0, %s199
      %s201 = sphi 0, %s199
      %s202 = sphi 0, %s201
      %s216 = sphi 0, %s202
      %s220 = sphi 0, %s220
      %s222 = sphi 0, %s220
      %s223 = sphi 0, %s222
      %s237 = sphi 0, %s223
      %s241 = sphi 0, %s241
      %s243 = sphi 0, %s241
      %s244 = sphi 0, %s243
      %s258 = sphi 0, %s244
      %s262 = sphi 0, %s262
      %s264 = sphi 0, %s262
      %s265 = sphi 0, %s264
      %s279 = sphi 0, %s265
      %s283 = sphi 0, %s283
      %s285 = sphi 0, %s283
      %s286 = sphi 0, %s285
      %s300 = sphi 0, %s286
      %s304 = sphi 0, %s304
      %s306 = sphi 0, %s304
      %s307 = sphi 0, %s306
      %s321 = sphi 0, %s307
      %s325 = sphi 0, %s325
      %s327 = sphi 0, %s325
      %s328 = sphi 0, %s327
      %s342 = sphi 0, %s328
      %s346 = sphi 0, %s346
      %s348 = sphi 0, %s346
      %s349 = sphi 0, %s348
      %s363 = sphi 0, %s349
      %s367 = sphi 0, %s367
      %s369 = sphi 0, %s367
      %s370 = sphi 0, %s369
      %s384 = sphi 0, %s370
      %s388 = sphi 0, %s388
      %s390 = sphi 0, %s388
      %s391 = sphi 0, %s390
      %s405 = sphi 0, %s391
      %s409 = sphi 0, %s409
      %s411 = sphi 0, %s409
      %s412 = sphi 0, %s411
      %s426 = sphi 0, %s412
      %s430 = sphi 0, %s430
      %s432 = sphi 0, %s430
      %s433 = sphi 0, %s432
      %s447 = sphi 0, %s433
      %s453 = sphi 0, %s455
      %s456 = sphi 0, %s453
      %s457 = sphi 0, %s456
      %s473 = sphi 0, %s457
    $region4: #{tpu_custom_call.1} parent=1 // loop_header_branch
      %42 = sbr.rel (%p40) target = $region8
    $region5: #{tpu_custom_call.1} parent=1 // loop_body
      %s44 = ssub.s32 %s39, 1
      %s45 = ssub.s32 %s39, 2
      %s46 = sadd.s32 %s39, 1
      %s47 = ssub.s32 %s39, %s46
      %p48 = scmp.eq.s32.totalorder %s47, 0
      %s50 = sadd.s32 %s49, 1
      %s51 = scalar_select %p48, %s49, %s50
      %p54 = pneg %p48
      %p55 = scmp.eq.s32.totalorder %s39, 1
      %p56 = por %p54, %p55
      %p57 = scmp.ne.s32.totalorder %s49, %s52
      %p58 = scmp.eq.s32.totalorder %s39, 0
      %p59 = por %p57, %p58
      %p60 = scmp.ne.s32.totalorder %s49, %s52
      %p61 = scmp.eq.s32.totalorder %s44, 1
      %p62 = por %p60, %p61
      %p63 = scmp.ne.s32.totalorder %s52, %s53
      %p64 = scmp.eq.s32.totalorder %s44, 0
      %p65 = por %p63, %p64
      %p66 = scmp.ne.s32.totalorder %s52, %s53
      %p67 = scmp.eq.s32.totalorder %s45, 1
      %p68 = por %p66, %p67
      %p70 = scmp.ne.s32.totalorder %s53, %s69
      %p71 = scmp.eq.s32.totalorder %s45, 0
      %p72 = por %p70, %p71
      %s74 = sadd.s32 %s73, 1
      %p77 = scmp.eq.s32.totalorder %s39, 1
      %p78 = scmp.ne.s32.totalorder %s73, %s75
      %p79 = scmp.eq.s32.totalorder %s39, 0
      %p80 = por %p78, %p79
      %p81 = scmp.ne.s32.totalorder %s73, %s75
      %p82 = scmp.eq.s32.totalorder %s44, 1
      %p83 = por %p81, %p82
      %p84 = scmp.ne.s32.totalorder %s75, %s76
      %p85 = scmp.eq.s32.totalorder %s44, 0
      %p86 = por %p84, %p85
      %p87 = scmp.ne.s32.totalorder %s75, %s76
      %p88 = scmp.eq.s32.totalorder %s45, 1
      %p89 = por %p87, %p88
      %p91 = scmp.ne.s32.totalorder %s76, %s90
      %p92 = scmp.eq.s32.totalorder %s45, 0
      %p93 = por %p91, %p92
      %s95 = sadd.s32 %s94, 1
      %p98 = scmp.eq.s32.totalorder %s39, 1
      %p99 = scmp.ne.s32.totalorder %s94, %s96
      %p100 = scmp.eq.s32.totalorder %s39, 0
      %p101 = por %p99, %p100
      %p102 = scmp.ne.s32.totalorder %s94, %s96
      %p103 = scmp.eq.s32.totalorder %s44, 1
      %p104 = por %p102, %p103
      %p105 = scmp.ne.s32.totalorder %s96, %s97
      %p106 = scmp.eq.s32.totalorder %s44, 0
      %p107 = por %p105, %p106
      %p108 = scmp.ne.s32.totalorder %s96, %s97
      %p109 = scmp.eq.s32.totalorder %s45, 1
      %p110 = por %p108, %p109
      %p112 = scmp.ne.s32.totalorder %s97, %s111
      %p113 = scmp.eq.s32.totalorder %s45, 0
      %p114 = por %p112, %p113
      %s116 = sadd.s32 %s115, 1
      %p119 = scmp.eq.s32.totalorder %s39, 1
      %p120 = scmp.ne.s32.totalorder %s115, %s117
      %p121 = scmp.eq.s32.totalorder %s39, 0
      %p122 = por %p120, %p121
      %p123 = scmp.ne.s32.totalorder %s115, %s117
      %p124 = scmp.eq.s32.totalorder %s44, 1
      %p125 = por %p123, %p124
      %p126 = scmp.ne.s32.totalorder %s117, %s118
      %p127 = scmp.eq.s32.totalorder %s44, 0
      %p128 = por %p126, %p127
      %p129 = scmp.ne.s32.totalorder %s117, %s118
      %p130 = scmp.eq.s32.totalorder %s45, 1
      %p131 = por %p129, %p130
      %p133 = scmp.ne.s32.totalorder %s118, %s132
      %p134 = scmp.eq.s32.totalorder %s45, 0
      %p135 = por %p133, %p134
      %s137 = sadd.s32 %s136, 1
      %p140 = scmp.eq.s32.totalorder %s39, 1
      %p141 = scmp.ne.s32.totalorder %s136, %s138
      %p142 = scmp.eq.s32.totalorder %s39, 0
      %p143 = por %p141, %p142
      %p144 = scmp.ne.s32.totalorder %s136, %s138
      %p145 = scmp.eq.s32.totalorder %s44, 1
      %p146 = por %p144, %p145
      %p147 = scmp.ne.s32.totalorder %s138, %s139
      %p148 = scmp.eq.s32.totalorder %s44, 0
      %p149 = por %p147, %p148
      %p150 = scmp.ne.s32.totalorder %s138, %s139
      %p151 = scmp.eq.s32.totalorder %s45, 1
      %p152 = por %p150, %p151
      %p154 = scmp.ne.s32.totalorder %s139, %s153
      %p155 = scmp.eq.s32.totalorder %s45, 0
      %p156 = por %p154, %p155
      %s158 = sadd.s32 %s157, 1
      %p161 = scmp.eq.s32.totalorder %s39, 1
      %p162 = scmp.ne.s32.totalorder %s157, %s159
      %p163 = scmp.eq.s32.totalorder %s39, 0
      %p164 = por %p162, %p163
      %p165 = scmp.ne.s32.totalorder %s157, %s159
      %p166 = scmp.eq.s32.totalorder %s44, 1
      %p167 = por %p165, %p166
      %p168 = scmp.ne.s32.totalorder %s159, %s160
      %p169 = scmp.eq.s32.totalorder %s44, 0
      %p170 = por %p168, %p169
      %p171 = scmp.ne.s32.totalorder %s159, %s160
      %p172 = scmp.eq.s32.totalorder %s45, 1
      %p173 = por %p171, %p172
      %p175 = scmp.ne.s32.totalorder %s160, %s174
      %p176 = scmp.eq.s32.totalorder %s45, 0
      %p177 = por %p175, %p176
      %s179 = sadd.s32 %s178, 1
      %p182 = scmp.eq.s32.totalorder %s39, 1
      %p183 = scmp.ne.s32.totalorder %s178, %s180
      %p184 = scmp.eq.s32.totalorder %s39, 0
      %p185 = por %p183, %p184
      %p186 = scmp.ne.s32.totalorder %s178, %s180
      %p187 = scmp.eq.s32.totalorder %s44, 1
      %p188 = por %p186, %p187
      %p189 = scmp.ne.s32.totalorder %s180, %s181
      %p190 = scmp.eq.s32.totalorder %s44, 0
      %p191 = por %p189, %p190
      %p192 = scmp.ne.s32.totalorder %s180, %s181
      %p193 = scmp.eq.s32.totalorder %s45, 1
      %p194 = por %p192, %p193
      %p196 = scmp.ne.s32.totalorder %s181, %s195
      %p197 = scmp.eq.s32.totalorder %s45, 0
      %p198 = por %p196, %p197
      %s200 = sadd.s32 %s199, 1
      %p203 = scmp.eq.s32.totalorder %s39, 1
      %p204 = scmp.ne.s32.totalorder %s199, %s201
      %p205 = scmp.eq.s32.totalorder %s39, 0
      %p206 = por %p204, %p205
      %p207 = scmp.ne.s32.totalorder %s199, %s201
      %p208 = scmp.eq.s32.totalorder %s44, 1
      %p209 = por %p207, %p208
      %p210 = scmp.ne.s32.totalorder %s201, %s202
      %p211 = scmp.eq.s32.totalorder %s44, 0
      %p212 = por %p210, %p211
      %p213 = scmp.ne.s32.totalorder %s201, %s202
      %p214 = scmp.eq.s32.totalorder %s45, 1
      %p215 = por %p213, %p214
      %p217 = scmp.ne.s32.totalorder %s202, %s216
      %p218 = scmp.eq.s32.totalorder %s45, 0
      %p219 = por %p217, %p218
      %s221 = sadd.s32 %s220, 1
      %p224 = scmp.eq.s32.totalorder %s39, 1
      %p225 = scmp.ne.s32.totalorder %s220, %s222
      %p226 = scmp.eq.s32.totalorder %s39, 0
      %p227 = por %p225, %p226
      %p228 = scmp.ne.s32.totalorder %s220, %s222
      %p229 = scmp.eq.s32.totalorder %s44, 1
      %p230 = por %p228, %p229
      %p231 = scmp.ne.s32.totalorder %s222, %s223
      %p232 = scmp.eq.s32.totalorder %s44, 0
      %p233 = por %p231, %p232
      %p234 = scmp.ne.s32.totalorder %s222, %s223
      %p235 = scmp.eq.s32.totalorder %s45, 1
      %p236 = por %p234, %p235
      %p238 = scmp.ne.s32.totalorder %s223, %s237
      %p239 = scmp.eq.s32.totalorder %s45, 0
      %p240 = por %p238, %p239
      %s242 = sadd.s32 %s241, 1
      %p245 = scmp.eq.s32.totalorder %s39, 1
      %p246 = scmp.ne.s32.totalorder %s241, %s243
      %p247 = scmp.eq.s32.totalorder %s39, 0
      %p248 = por %p246, %p247
      %p249 = scmp.ne.s32.totalorder %s241, %s243
      %p250 = scmp.eq.s32.totalorder %s44, 1
      %p251 = por %p249, %p250
      %p252 = scmp.ne.s32.totalorder %s243, %s244
      %p253 = scmp.eq.s32.totalorder %s44, 0
      %p254 = por %p252, %p253
      %p255 = scmp.ne.s32.totalorder %s243, %s244
      %p256 = scmp.eq.s32.totalorder %s45, 1
      %p257 = por %p255, %p256
      %p259 = scmp.ne.s32.totalorder %s244, %s258
      %p260 = scmp.eq.s32.totalorder %s45, 0
      %p261 = por %p259, %p260
      %s263 = sadd.s32 %s262, 1
      %p266 = scmp.eq.s32.totalorder %s39, 1
      %p267 = scmp.ne.s32.totalorder %s262, %s264
      %p268 = scmp.eq.s32.totalorder %s39, 0
      %p269 = por %p267, %p268
      %p270 = scmp.ne.s32.totalorder %s262, %s264
      %p271 = scmp.eq.s32.totalorder %s44, 1
      %p272 = por %p270, %p271
      %p273 = scmp.ne.s32.totalorder %s264, %s265
      %p274 = scmp.eq.s32.totalorder %s44, 0
      %p275 = por %p273, %p274
      %p276 = scmp.ne.s32.totalorder %s264, %s265
      %p277 = scmp.eq.s32.totalorder %s45, 1
      %p278 = por %p276, %p277
      %p280 = scmp.ne.s32.totalorder %s265, %s279
      %p281 = scmp.eq.s32.totalorder %s45, 0
      %p282 = por %p280, %p281
      %s284 = sadd.s32 %s283, 1
      %p287 = scmp.eq.s32.totalorder %s39, 1
      %p288 = scmp.ne.s32.totalorder %s283, %s285
      %p289 = scmp.eq.s32.totalorder %s39, 0
      %p290 = por %p288, %p289
      %p291 = scmp.ne.s32.totalorder %s283, %s285
      %p292 = scmp.eq.s32.totalorder %s44, 1
      %p293 = por %p291, %p292
      %p294 = scmp.ne.s32.totalorder %s285, %s286
      %p295 = scmp.eq.s32.totalorder %s44, 0
      %p296 = por %p294, %p295
      %p297 = scmp.ne.s32.totalorder %s285, %s286
      %p298 = scmp.eq.s32.totalorder %s45, 1
      %p299 = por %p297, %p298
      %p301 = scmp.ne.s32.totalorder %s286, %s300
      %p302 = scmp.eq.s32.totalorder %s45, 0
      %p303 = por %p301, %p302
      %s305 = sadd.s32 %s304, 1
      %p308 = scmp.eq.s32.totalorder %s39, 1
      %p309 = scmp.ne.s32.totalorder %s304, %s306
      %p310 = scmp.eq.s32.totalorder %s39, 0
      %p311 = por %p309, %p310
      %p312 = scmp.ne.s32.totalorder %s304, %s306
      %p313 = scmp.eq.s32.totalorder %s44, 1
      %p314 = por %p312, %p313
      %p315 = scmp.ne.s32.totalorder %s306, %s307
      %p316 = scmp.eq.s32.totalorder %s44, 0
      %p317 = por %p315, %p316
      %p318 = scmp.ne.s32.totalorder %s306, %s307
      %p319 = scmp.eq.s32.totalorder %s45, 1
      %p320 = por %p318, %p319
      %p322 = scmp.ne.s32.totalorder %s307, %s321
      %p323 = scmp.eq.s32.totalorder %s45, 0
      %p324 = por %p322, %p323
      %s326 = sadd.s32 %s325, 1
      %p329 = scmp.eq.s32.totalorder %s39, 1
      %p330 = scmp.ne.s32.totalorder %s325, %s327
      %p331 = scmp.eq.s32.totalorder %s39, 0
      %p332 = por %p330, %p331
      %p333 = scmp.ne.s32.totalorder %s325, %s327
      %p334 = scmp.eq.s32.totalorder %s44, 1
      %p335 = por %p333, %p334
      %p336 = scmp.ne.s32.totalorder %s327, %s328
      %p337 = scmp.eq.s32.totalorder %s44, 0
      %p338 = por %p336, %p337
      %p339 = scmp.ne.s32.totalorder %s327, %s328
      %p340 = scmp.eq.s32.totalorder %s45, 1
      %p341 = por %p339, %p340
      %p343 = scmp.ne.s32.totalorder %s328, %s342
      %p344 = scmp.eq.s32.totalorder %s45, 0
      %p345 = por %p343, %p344
      %s347 = sadd.s32 %s346, 1
      %p350 = scmp.eq.s32.totalorder %s39, 1
      %p351 = scmp.ne.s32.totalorder %s346, %s348
      %p352 = scmp.eq.s32.totalorder %s39, 0
      %p353 = por %p351, %p352
      %p354 = scmp.ne.s32.totalorder %s346, %s348
      %p355 = scmp.eq.s32.totalorder %s44, 1
      %p356 = por %p354, %p355
      %p357 = scmp.ne.s32.totalorder %s348, %s349
      %p358 = scmp.eq.s32.totalorder %s44, 0
      %p359 = por %p357, %p358
      %p360 = scmp.ne.s32.totalorder %s348, %s349
      %p361 = scmp.eq.s32.totalorder %s45, 1
      %p362 = por %p360, %p361
      %p364 = scmp.ne.s32.totalorder %s349, %s363
      %p365 = scmp.eq.s32.totalorder %s45, 0
      %p366 = por %p364, %p365
      %s368 = sadd.s32 %s367, 1
      %p371 = scmp.eq.s32.totalorder %s39, 1
      %p372 = scmp.ne.s32.totalorder %s367, %s369
      %p373 = scmp.eq.s32.totalorder %s39, 0
      %p374 = por %p372, %p373
      %p375 = scmp.ne.s32.totalorder %s367, %s369
      %p376 = scmp.eq.s32.totalorder %s44, 1
      %p377 = por %p375, %p376
      %p378 = scmp.ne.s32.totalorder %s369, %s370
      %p379 = scmp.eq.s32.totalorder %s44, 0
      %p380 = por %p378, %p379
      %p381 = scmp.ne.s32.totalorder %s369, %s370
      %p382 = scmp.eq.s32.totalorder %s45, 1
      %p383 = por %p381, %p382
      %p385 = scmp.ne.s32.totalorder %s370, %s384
      %p386 = scmp.eq.s32.totalorder %s45, 0
      %p387 = por %p385, %p386
      %s389 = sadd.s32 %s388, 1
      %p392 = scmp.eq.s32.totalorder %s39, 1
      %p393 = scmp.ne.s32.totalorder %s388, %s390
      %p394 = scmp.eq.s32.totalorder %s39, 0
      %p395 = por %p393, %p394
      %p396 = scmp.ne.s32.totalorder %s388, %s390
      %p397 = scmp.eq.s32.totalorder %s44, 1
      %p398 = por %p396, %p397
      %p399 = scmp.ne.s32.totalorder %s390, %s391
      %p400 = scmp.eq.s32.totalorder %s44, 0
      %p401 = por %p399, %p400
      %p402 = scmp.ne.s32.totalorder %s390, %s391
      %p403 = scmp.eq.s32.totalorder %s45, 1
      %p404 = por %p402, %p403
      %p406 = scmp.ne.s32.totalorder %s391, %s405
      %p407 = scmp.eq.s32.totalorder %s45, 0
      %p408 = por %p406, %p407
      %s410 = sadd.s32 %s409, 1
      %p413 = scmp.eq.s32.totalorder %s39, 1
      %p414 = scmp.ne.s32.totalorder %s409, %s411
      %p415 = scmp.eq.s32.totalorder %s39, 0
      %p416 = por %p414, %p415
      %p417 = scmp.ne.s32.totalorder %s409, %s411
      %p418 = scmp.eq.s32.totalorder %s44, 1
      %p419 = por %p417, %p418
      %p420 = scmp.ne.s32.totalorder %s411, %s412
      %p421 = scmp.eq.s32.totalorder %s44, 0
      %p422 = por %p420, %p421
      %p423 = scmp.ne.s32.totalorder %s411, %s412
      %p424 = scmp.eq.s32.totalorder %s45, 1
      %p425 = por %p423, %p424
      %p427 = scmp.ne.s32.totalorder %s412, %s426
      %p428 = scmp.eq.s32.totalorder %s45, 0
      %p429 = por %p427, %p428
      %s431 = sadd.s32 %s430, 1
      %p434 = scmp.eq.s32.totalorder %s39, 1
      %p435 = scmp.ne.s32.totalorder %s430, %s432
      %p436 = scmp.eq.s32.totalorder %s39, 0
      %p437 = por %p435, %p436
      %p438 = scmp.ne.s32.totalorder %s430, %s432
      %p439 = scmp.eq.s32.totalorder %s44, 1
      %p440 = por %p438, %p439
      %p441 = scmp.ne.s32.totalorder %s432, %s433
      %p442 = scmp.eq.s32.totalorder %s44, 0
      %p443 = por %p441, %p442
      %p444 = scmp.ne.s32.totalorder %s432, %s433
      %p445 = scmp.eq.s32.totalorder %s45, 1
      %p446 = por %p444, %p445
      %p448 = scmp.ne.s32.totalorder %s433, %s447
      %p449 = scmp.eq.s32.totalorder %s45, 0
      %p450 = por %p448, %p449
      %s451 = ssub.s32 %s39, %s46
      %p452 = scmp.eq.s32.totalorder %s451, 0
      %s454 = sadd.s32 %s453, 1
      %s455 = scalar_select %p452, %s453, %s454
      %p458 = pneg %p452
      %p459 = scmp.eq.s32.totalorder %s39, 1
      %p460 = por %p458, %p459
      %p461 = scmp.ne.s32.totalorder %s453, %s456
      %p462 = scmp.eq.s32.totalorder %s39, 0
      %p463 = por %p461, %p462
      %p464 = scmp.ne.s32.totalorder %s453, %s456
      %p465 = scmp.eq.s32.totalorder %s44, 1
      %p466 = por %p464, %p465
      %p467 = scmp.ne.s32.totalorder %s456, %s457
      %p468 = scmp.eq.s32.totalorder %s44, 0
      %p469 = por %p467, %p468
      %p470 = scmp.ne.s32.totalorder %s456, %s457
      %p471 = scmp.eq.s32.totalorder %s45, 1
      %p472 = por %p470, %p471
      %p474 = scmp.ne.s32.totalorder %s457, %s473
      %p475 = scmp.eq.s32.totalorder %s45, 0
      %p476 = por %p474, %p475
      %p477 = scmp.le.s32.totalorder 1, %s39
      %p478 = scmp.lt.s32.totalorder %s39, 3
      %p479 = pnand %p477, %p478
      %p480 = pneg %p479
      // Predicated region
      $region9: #{tpu_custom_call.1} parent=5 // pred_check
        _
      $region10: #{tpu_custom_call.1} parent=5 // pred_check_branch
        %482 = sbr.rel (%p479) target = $region12
      $region11: #{tpu_custom_call.1} parent=5 // pred_region
        %s483 = ssub.s32 %s39, 1
        // Predicated region
        $region13: #{tpu_custom_call.1} parent=11 // pred_check
          %p484 = pneg %p86
        $region14: #{tpu_custom_call.1} parent=11 // pred_check_branch
          %486 = sbr.rel (%p484) target = $region16
        $region15: #{tpu_custom_call.1} parent=11 // pred_region
          %488 = vsyncadd [#allocation6], 0
          %s489 = sshll.u32 %s1, 4
          %s490 = int_to_ptr.hbm [resolvable:$true] %s489
          %s491 = sshll.u32 [#allocation5], 4
          %s492 = int_to_ptr.vmem [resolvable:$true] %s491
          %497 = dma.hbm_to_vmem [thread:$0]  %s490, 128, %s492, [#allocation6], 64, 64, 4
        $region16: #{tpu_custom_call.1} parent=11 // pred_fallthru
          _
        // Predicated region
        $region17: #{tpu_custom_call.1} parent=11 // pred_check
          %p498 = pneg %p107
        $region18: #{tpu_custom_call.1} parent=11 // pred_check_branch
          %500 = sbr.rel (%p498) target = $region20
        $region19: #{tpu_custom_call.1} parent=11 // pred_region
          %502 = vsyncadd [#allocation6], 0
          %s504 = sshll.u32 %s2, 4
          %s505 = int_to_ptr.hbm [resolvable:$true] %s504
          %s506 = sshll.u32 [#allocation7], 4
          %s507 = int_to_ptr.vmem [resolvable:$true] %s506
          %509 = dma.hbm_to_vmem [thread:$0]  %s505, 16, %s507, [#allocation6]
        $region20: #{tpu_custom_call.1} parent=11 // pred_fallthru
          _
        // Predicated region
        $region21: #{tpu_custom_call.1} parent=11 // pred_check
          %p510 = pneg %p128
        $region22: #{tpu_custom_call.1} parent=11 // pred_check_branch
          %512 = sbr.rel (%p510) target = $region24
        $region23: #{tpu_custom_call.1} parent=11 // pred_region
          %514 = vsyncadd [#allocation9], 0
          %s515 = sshll.u32 %s3, 4
          %s516 = int_to_ptr.hbm [resolvable:$true] %s515
          %s517 = sshll.u32 [#allocation8], 4
          %s518 = int_to_ptr.vmem [resolvable:$true] %s517
          %523 = dma.hbm_to_vmem [thread:$0]  %s516, 256, %s518, [#allocation9], 64, 64, 4
        $region24: #{tpu_custom_call.1} parent=11 // pred_fallthru
          _
        // Predicated region
        $region25: #{tpu_custom_call.1} parent=11 // pred_check
          %p524 = pneg %p149
        $region26: #{tpu_custom_call.1} parent=11 // pred_check_branch
          %526 = sbr.rel (%p524) target = $region28
        $region27: #{tpu_custom_call.1} parent=11 // pred_region
          %528 = vsyncadd [#allocation9], 0
          %s530 = sshll.u32 %s4, 4
          %s531 = int_to_ptr.hbm [resolvable:$true] %s530
          %s532 = sshll.u32 [#allocation10], 4
          %s533 = int_to_ptr.vmem [resolvable:$true] %s532
          %535 = dma.hbm_to_vmem [thread:$0]  %s531, 16, %s533, [#allocation9]
        $region28: #{tpu_custom_call.1} parent=11 // pred_fallthru
          _
        // Predicated region
        $region29: #{tpu_custom_call.1} parent=11 // pred_check
          %p536 = pneg %p170
        $region30: #{tpu_custom_call.1} parent=11 // pred_check_branch
          %538 = sbr.rel (%p536) target = $region32
        $region31: #{tpu_custom_call.1} parent=11 // pred_region
          %540 = vsyncadd [#allocation12], 0
          %s541 = sshll.u32 %s5, 4
          %s542 = int_to_ptr.hbm [resolvable:$true] %s541
          %s543 = sshll.u32 [#allocation11], 4
          %s544 = int_to_ptr.vmem [resolvable:$true] %s543
          %549 = dma.hbm_to_vmem [thread:$0]  %s542, 1280, %s544, [#allocation12], 64, 64, 4
        $region32: #{tpu_custom_call.1} parent=11 // pred_fallthru
          _
        // Predicated region
        $region33: #{tpu_custom_call.1} parent=11 // pred_check
          %p550 = pneg %p191
        $region34: #{tpu_custom_call.1} parent=11 // pred_check_branch
          %552 = sbr.rel (%p550) target = $region36
        $region35: #{tpu_custom_call.1} parent=11 // pred_region
          %554 = vsyncadd [#allocation12], 0
          %s555 = sshll.u32 %s6, 4
          %s556 = int_to_ptr.hbm [resolvable:$true] %s555
          %s557 = sshll.u32 [#allocation13], 4
          %s558 = int_to_ptr.vmem [resolvable:$true] %s557
          %563 = dma.hbm_to_vmem [thread:$0]  %s556, 1280, %s558, [#allocation12], 64, 64, 4
        $region36: #{tpu_custom_call.1} parent=11 // pred_fallthru
          _
        // Predicated region
        $region37: #{tpu_custom_call.1} parent=11 // pred_check
          %p564 = pneg %p212
        $region38: #{tpu_custom_call.1} parent=11 // pred_check_branch
          %566 = sbr.rel (%p564) target = $region40
        $region39: #{tpu_custom_call.1} parent=11 // pred_region
          %568 = vsyncadd [#allocation15], 0
          %s570 = sshll.u32 %s7, 4
          %s571 = int_to_ptr.hbm [resolvable:$true] %s570
          %s572 = sshll.u32 [#allocation14], 4
          %s573 = int_to_ptr.vmem [resolvable:$true] %s572
          %575 = dma.hbm_to_vmem [thread:$0]  %s571, 16, %s573, [#allocation15]
        $region40: #{tpu_custom_call.1} parent=11 // pred_fallthru
          _
        // Predicated region
        $region41: #{tpu_custom_call.1} parent=11 // pred_check
          %p576 = pneg %p233
        $region42: #{tpu_custom_call.1} parent=11 // pred_check_branch
          %578 = sbr.rel (%p576) target = $region44
        $region43: #{tpu_custom_call.1} parent=11 // pred_region
          %580 = vsyncadd [#allocation15], 0
          %s582 = sshll.u32 %s8, 4
          %s583 = int_to_ptr.hbm [resolvable:$true] %s582
          %s584 = sshll.u32 [#allocation16], 4
          %s585 = int_to_ptr.vmem [resolvable:$true] %s584
          %587 = dma.hbm_to_vmem [thread:$0]  %s583, 16, %s585, [#allocation15]
        $region44: #{tpu_custom_call.1} parent=11 // pred_fallthru
          _
        // Predicated region
        $region45: #{tpu_custom_call.1} parent=11 // pred_check
          %p588 = pneg %p254
        $region46: #{tpu_custom_call.1} parent=11 // pred_check_branch
          %590 = sbr.rel (%p588) target = $region48
        $region47: #{tpu_custom_call.1} parent=11 // pred_region
          %592 = vsyncadd [#allocation18], 0
          %s593 = sshll.u32 %s9, 4
          %s594 = int_to_ptr.hbm [resolvable:$true] %s593
          %s595 = sshll.u32 [#allocation17], 4
          %s596 = int_to_ptr.vmem [resolvable:$true] %s595
          %601 = dma.hbm_to_vmem [thread:$0]  %s594, 1280, %s596, [#allocation18], 64, 64, 4
        $region48: #{tpu_custom_call.1} parent=11 // pred_fallthru
          _
        // Predicated region
        $region49: #{tpu_custom_call.1} parent=11 // pred_check
          %p602 = pneg %p275
        $region50: #{tpu_custom_call.1} parent=11 // pred_check_branch
          %604 = sbr.rel (%p602) target = $region52
        $region51: #{tpu_custom_call.1} parent=11 // pred_region
          %606 = vsyncadd [#allocation18], 0
          %s607 = sshll.u32 %s10, 4
          %s608 = int_to_ptr.hbm [resolvable:$true] %s607
          %s609 = sshll.u32 [#allocation19], 4
          %s610 = int_to_ptr.vmem [resolvable:$true] %s609
          %615 = dma.hbm_to_vmem [thread:$0]  %s608, 1280, %s610, [#allocation18], 64, 64, 4
        $region52: #{tpu_custom_call.1} parent=11 // pred_fallthru
          _
        // Predicated region
        $region53: #{tpu_custom_call.1} parent=11 // pred_check
          %p616 = pneg %p296
        $region54: #{tpu_custom_call.1} parent=11 // pred_check_branch
          %618 = sbr.rel (%p616) target = $region56
        $region55: #{tpu_custom_call.1} parent=11 // pred_region
          %620 = vsyncadd [#allocation21], 0
          %s622 = sshll.u32 %s11, 4
          %s623 = int_to_ptr.hbm [resolvable:$true] %s622
          %s624 = sshll.u32 [#allocation20], 4
          %s625 = int_to_ptr.vmem [resolvable:$true] %s624
          %627 = dma.hbm_to_vmem [thread:$0]  %s623, 16, %s625, [#allocation21]
        $region56: #{tpu_custom_call.1} parent=11 // pred_fallthru
          _
        // Predicated region
        $region57: #{tpu_custom_call.1} parent=11 // pred_check
          %p628 = pneg %p317
        $region58: #{tpu_custom_call.1} parent=11 // pred_check_branch
          %630 = sbr.rel (%p628) target = $region60
        $region59: #{tpu_custom_call.1} parent=11 // pred_region
          %632 = vsyncadd [#allocation21], 0
          %s634 = sshll.u32 %s12, 4
          %s635 = int_to_ptr.hbm [resolvable:$true] %s634
          %s636 = sshll.u32 [#allocation22], 4
          %s637 = int_to_ptr.vmem [resolvable:$true] %s636
          %639 = dma.hbm_to_vmem [thread:$0]  %s635, 16, %s637, [#allocation21]
        $region60: #{tpu_custom_call.1} parent=11 // pred_fallthru
          _
        // Predicated region
        $region61: #{tpu_custom_call.1} parent=11 // pred_check
          %p640 = pneg %p338
        $region62: #{tpu_custom_call.1} parent=11 // pred_check_branch
          %642 = sbr.rel (%p640) target = $region64
        $region63: #{tpu_custom_call.1} parent=11 // pred_region
          %644 = vsyncadd [#allocation24], 0
          %s645 = sshll.u32 %s13, 4
          %s646 = int_to_ptr.hbm [resolvable:$true] %s645
          %s647 = sshll.u32 [#allocation23], 4
          %s648 = int_to_ptr.vmem [resolvable:$true] %s647
          %653 = dma.hbm_to_vmem [thread:$0]  %s646, 256, %s648, [#allocation24], 64, 64, 4
        $region64: #{tpu_custom_call.1} parent=11 // pred_fallthru
          _
        // Predicated region
        $region65: #{tpu_custom_call.1} parent=11 // pred_check
          %p654 = pneg %p359
        $region66: #{tpu_custom_call.1} parent=11 // pred_check_branch
          %656 = sbr.rel (%p654) target = $region68
        $region67: #{tpu_custom_call.1} parent=11 // pred_region
          %658 = vsyncadd [#allocation24], 0
          %s660 = sshll.u32 %s14, 4
          %s661 = int_to_ptr.hbm [resolvable:$true] %s660
          %s662 = sshll.u32 [#allocation25], 4
          %s663 = int_to_ptr.vmem [resolvable:$true] %s662
          %665 = dma.hbm_to_vmem [thread:$0]  %s661, 16, %s663, [#allocation24]
        $region68: #{tpu_custom_call.1} parent=11 // pred_fallthru
          _
        // Predicated region
        $region69: #{tpu_custom_call.1} parent=11 // pred_check
          %p666 = pneg %p380
        $region70: #{tpu_custom_call.1} parent=11 // pred_check_branch
          %668 = sbr.rel (%p666) target = $region72
        $region71: #{tpu_custom_call.1} parent=11 // pred_region
          %670 = vsyncadd [#allocation27], 0
          %s671 = sshll.u32 %s15, 4
          %s672 = int_to_ptr.hbm [resolvable:$true] %s671
          %s673 = sshll.u32 [#allocation26], 4
          %s674 = int_to_ptr.vmem [resolvable:$true] %s673
          %679 = dma.hbm_to_vmem [thread:$0]  %s672, 256, %s674, [#allocation27], 64, 64, 4
        $region72: #{tpu_custom_call.1} parent=11 // pred_fallthru
          _
        // Predicated region
        $region73: #{tpu_custom_call.1} parent=11 // pred_check
          %p680 = pneg %p401
        $region74: #{tpu_custom_call.1} parent=11 // pred_check_branch
          %682 = sbr.rel (%p680) target = $region76
        $region75: #{tpu_custom_call.1} parent=11 // pred_region
          %684 = vsyncadd [#allocation27], 0
          %s686 = sshll.u32 %s16, 4
          %s687 = int_to_ptr.hbm [resolvable:$true] %s686
          %s688 = sshll.u32 [#allocation28], 4
          %s689 = int_to_ptr.vmem [resolvable:$true] %s688
          %691 = dma.hbm_to_vmem [thread:$0]  %s687, 16, %s689, [#allocation27]
        $region76: #{tpu_custom_call.1} parent=11 // pred_fallthru
          _
        // Predicated region
        $region77: #{tpu_custom_call.1} parent=11 // pred_check
          %p692 = pneg %p422
        $region78: #{tpu_custom_call.1} parent=11 // pred_check_branch
          %694 = sbr.rel (%p692) target = $region80
        $region79: #{tpu_custom_call.1} parent=11 // pred_region
          _
        $region80: #{tpu_custom_call.1} parent=11 // pred_fallthru
          _
        // Predicated region
        $region81: #{tpu_custom_call.1} parent=11 // pred_check
          %p695 = pneg %p443
        $region82: #{tpu_custom_call.1} parent=11 // pred_check_branch
          %697 = sbr.rel (%p695) target = $region84
        $region83: #{tpu_custom_call.1} parent=11 // pred_region
          _
        $region84: #{tpu_custom_call.1} parent=11 // pred_fallthru
          _
      $region12: #{tpu_custom_call.1} parent=5 // pred_fallthru
        _
      %p698 = scmp.lt.s32.totalorder %s39, 2
      // Predicated region
      $region85: #{tpu_custom_call.1} parent=5 // pred_check
        %p699 = pneg %p698
      $region86: #{tpu_custom_call.1} parent=5 // pred_check_branch
        %701 = sbr.rel (%p699) target = $region88
      $region87: #{tpu_custom_call.1} parent=5 // pred_region
        // Predicated region
        $region89: #{tpu_custom_call.1} parent=87 // pred_check
          %p702 = pneg %p59
        $region90: #{tpu_custom_call.1} parent=87 // pred_check_branch
          %704 = sbr.rel (%p702) target = $region92
        $region91: #{tpu_custom_call.1} parent=87 // pred_region
          %s705 = sand.u32 %s49, 1
          %s706 = scalar_lea.sflag [#allocation3], %s705
          %s707 = sand.u32 %s49, 1
          %s708 = smul.addr %s707, 8
          %s709 = scalar_lea.vmem [#allocation2], %s708
          %711 = vsyncadd %s706, 0
          %s712 = smul.addr %s39, 8
          %s713 = scalar_lea.hbm %s0, %s712
          %s715 = sshll.u32 %s713, 4
          %s716 = int_to_ptr.hbm [resolvable:$true] %s715
          %s717 = sshll.u32 %s709, 4
          %s718 = int_to_ptr.vmem [resolvable:$true] %s717
          %720 = dma.hbm_to_vmem [thread:$0]  %s716, 128, %s718, %s706
        $region92: #{tpu_custom_call.1} parent=87 // pred_fallthru
          _
      $region88: #{tpu_custom_call.1} parent=5 // pred_fallthru
        _
      %p721 = scmp.le.s32.totalorder 1, %s39
      %p722 = scmp.lt.s32.totalorder %s39, 3
      %p723 = pnand %p721, %p722
      %p724 = pneg %p723
      // Predicated region
      $region93: #{tpu_custom_call.1} parent=5 // pred_check
        _
      $region94: #{tpu_custom_call.1} parent=5 // pred_check_branch
        %726 = sbr.rel (%p723) target = $region96
      $region95: #{tpu_custom_call.1} parent=5 // pred_region
        %s727 = ssub.s32 %s39, 1
        %s728 = sand.u32 %s52, 1
        %s729 = scalar_lea.sflag [#allocation3], %s728
        %s730 = sand.u32 %s52, 1
        %s731 = smul.addr %s730, 8
        %s732 = scalar_lea.vmem [#allocation2], %s731
        // Predicated region
        $region97: #{tpu_custom_call.1} parent=95 // pred_check
          %p733 = pneg %p65
        $region98: #{tpu_custom_call.1} parent=95 // pred_check_branch
          %735 = sbr.rel (%p733) target = $region100
        $region99: #{tpu_custom_call.1} parent=95 // pred_region
          %737 = dma.done %s729, 128
        $region100: #{tpu_custom_call.1} parent=95 // pred_fallthru
          _
        // Predicated region
        $region101: #{tpu_custom_call.1} parent=95 // pred_check
          %p738 = pneg %p86
        $region102: #{tpu_custom_call.1} parent=95 // pred_check_branch
          %740 = sbr.rel (%p738) target = $region104
        $region103: #{tpu_custom_call.1} parent=95 // pred_region
          %742 = dma.done [#allocation6], 128
        $region104: #{tpu_custom_call.1} parent=95 // pred_fallthru
          _
        // Predicated region
        $region105: #{tpu_custom_call.1} parent=95 // pred_check
          %p743 = pneg %p107
        $region106: #{tpu_custom_call.1} parent=95 // pred_check_branch
          %745 = sbr.rel (%p743) target = $region108
        $region107: #{tpu_custom_call.1} parent=95 // pred_region
          %747 = dma.done [#allocation6], 16
        $region108: #{tpu_custom_call.1} parent=95 // pred_fallthru
          _
        // Predicated region
        $region109: #{tpu_custom_call.1} parent=95 // pred_check
          %p748 = pneg %p128
        $region110: #{tpu_custom_call.1} parent=95 // pred_check_branch
          %750 = sbr.rel (%p748) target = $region112
        $region111: #{tpu_custom_call.1} parent=95 // pred_region
          %752 = dma.done [#allocation9], 256
        $region112: #{tpu_custom_call.1} parent=95 // pred_fallthru
          _
        // Predicated region
        $region113: #{tpu_custom_call.1} parent=95 // pred_check
          %p753 = pneg %p149
        $region114: #{tpu_custom_call.1} parent=95 // pred_check_branch
          %755 = sbr.rel (%p753) target = $region116
        $region115: #{tpu_custom_call.1} parent=95 // pred_region
          %757 = dma.done [#allocation9], 16
        $region116: #{tpu_custom_call.1} parent=95 // pred_fallthru
          _
        // Predicated region
        $region117: #{tpu_custom_call.1} parent=95 // pred_check
          %p758 = pneg %p170
        $region118: #{tpu_custom_call.1} parent=95 // pred_check_branch
          %760 = sbr.rel (%p758) target = $region120
        $region119: #{tpu_custom_call.1} parent=95 // pred_region
          %762 = dma.done [#allocation12], 1280
        $region120: #{tpu_custom_call.1} parent=95 // pred_fallthru
          _
        // Predicated region
        $region121: #{tpu_custom_call.1} parent=95 // pred_check
          %p763 = pneg %p191
        $region122: #{tpu_custom_call.1} parent=95 // pred_check_branch
          %765 = sbr.rel (%p763) target = $region124
        $region123: #{tpu_custom_call.1} parent=95 // pred_region
          %767 = dma.done [#allocation12], 1280
        $region124: #{tpu_custom_call.1} parent=95 // pred_fallthru
          _
        // Predicated region
        $region125: #{tpu_custom_call.1} parent=95 // pred_check
          %p768 = pneg %p212
        $region126: #{tpu_custom_call.1} parent=95 // pred_check_branch
          %770 = sbr.rel (%p768) target = $region128
        $region127: #{tpu_custom_call.1} parent=95 // pred_region
          %772 = dma.done [#allocation15], 16
        $region128: #{tpu_custom_call.1} parent=95 // pred_fallthru
          _
        // Predicated region
        $region129: #{tpu_custom_call.1} parent=95 // pred_check
          %p773 = pneg %p233
        $region130: #{tpu_custom_call.1} parent=95 // pred_check_branch
          %775 = sbr.rel (%p773) target = $region132
        $region131: #{tpu_custom_call.1} parent=95 // pred_region
          %777 = dma.done [#allocation15], 16
        $region132: #{tpu_custom_call.1} parent=95 // pred_fallthru
          _
        // Predicated region
        $region133: #{tpu_custom_call.1} parent=95 // pred_check
          %p778 = pneg %p254
        $region134: #{tpu_custom_call.1} parent=95 // pred_check_branch
          %780 = sbr.rel (%p778) target = $region136
        $region135: #{tpu_custom_call.1} parent=95 // pred_region
          %782 = dma.done [#allocation18], 1280
        $region136: #{tpu_custom_call.1} parent=95 // pred_fallthru
          _
        // Predicated region
        $region137: #{tpu_custom_call.1} parent=95 // pred_check
          %p783 = pneg %p275
        $region138: #{tpu_custom_call.1} parent=95 // pred_check_branch
          %785 = sbr.rel (%p783) target = $region140
        $region139: #{tpu_custom_call.1} parent=95 // pred_region
          %787 = dma.done [#allocation18], 1280
        $region140: #{tpu_custom_call.1} parent=95 // pred_fallthru
          _
        // Predicated region
        $region141: #{tpu_custom_call.1} parent=95 // pred_check
          %p788 = pneg %p296
        $region142: #{tpu_custom_call.1} parent=95 // pred_check_branch
          %790 = sbr.rel (%p788) target = $region144
        $region143: #{tpu_custom_call.1} parent=95 // pred_region
          %792 = dma.done [#allocation21], 16
        $region144: #{tpu_custom_call.1} parent=95 // pred_fallthru
          _
        // Predicated region
        $region145: #{tpu_custom_call.1} parent=95 // pred_check
          %p793 = pneg %p317
        $region146: #{tpu_custom_call.1} parent=95 // pred_check_branch
          %795 = sbr.rel (%p793) target = $region148
        $region147: #{tpu_custom_call.1} parent=95 // pred_region
          %797 = dma.done [#allocation21], 16
        $region148: #{tpu_custom_call.1} parent=95 // pred_fallthru
          _
        // Predicated region
        $region149: #{tpu_custom_call.1} parent=95 // pred_check
          %p798 = pneg %p338
        $region150: #{tpu_custom_call.1} parent=95 // pred_check_branch
          %800 = sbr.rel (%p798) target = $region152
        $region151: #{tpu_custom_call.1} parent=95 // pred_region
          %802 = dma.done [#allocation24], 256
        $region152: #{tpu_custom_call.1} parent=95 // pred_fallthru
          _
        // Predicated region
        $region153: #{tpu_custom_call.1} parent=95 // pred_check
          %p803 = pneg %p359
        $region154: #{tpu_custom_call.1} parent=95 // pred_check_branch
          %805 = sbr.rel (%p803) target = $region156
        $region155: #{tpu_custom_call.1} parent=95 // pred_region
          %807 = dma.done [#allocation24], 16
        $region156: #{tpu_custom_call.1} parent=95 // pred_fallthru
          _
        // Predicated region
        $region157: #{tpu_custom_call.1} parent=95 // pred_check
          %p808 = pneg %p380
        $region158: #{tpu_custom_call.1} parent=95 // pred_check_branch
          %810 = sbr.rel (%p808) target = $region160
        $region159: #{tpu_custom_call.1} parent=95 // pred_region
          %812 = dma.done [#allocation27], 256
        $region160: #{tpu_custom_call.1} parent=95 // pred_fallthru
          _
        // Predicated region
        $region161: #{tpu_custom_call.1} parent=95 // pred_check
          %p813 = pneg %p401
        $region162: #{tpu_custom_call.1} parent=95 // pred_check_branch
          %815 = sbr.rel (%p813) target = $region164
        $region163: #{tpu_custom_call.1} parent=95 // pred_region
          %817 = dma.done [#allocation27], 16
        $region164: #{tpu_custom_call.1} parent=95 // pred_fallthru
          _
        %s818 = sand.u32 %s52, 1
        %s819 = scalar_lea.sflag [#allocation3], %s818
        %s820 = sand.u32 %s52, 1
        %s821 = smul.addr %s820, 8
        %s822 = scalar_lea.vmem [#allocation2], %s821
        %p823 = pneg %p65
        %p824 = pneg %p62
        %p825 = pneg %p86
        %p826 = pneg %p83
        %p827 = pneg %p107
        %p828 = pneg %p104
        %p829 = pneg %p128
        %p830 = pneg %p125
        %p831 = pneg %p149
        %p832 = pneg %p146
        %p833 = pneg %p170
        %p834 = pneg %p167
        %p835 = pneg %p191
        %p836 = pneg %p188
        %p837 = pneg %p212
        %p838 = pneg %p209
        %p839 = pneg %p233
        %p840 = pneg %p230
        %p841 = pneg %p254
        %p842 = pneg %p251
        %p843 = pneg %p275
        %p844 = pneg %p272
        %p845 = pneg %p296
        %p846 = pneg %p293
        %p847 = pneg %p317
        %p848 = pneg %p314
        %p849 = pneg %p338
        %p850 = pneg %p335
        %p851 = pneg %p359
        %p852 = pneg %p356
        %p853 = pneg %p380
        %p854 = pneg %p377
        %p855 = pneg %p401
        %p856 = pneg %p398
        %p857 = pneg %p422
        %p858 = pneg %p419
        %p859 = pneg %p443
        %p860 = pneg %p440
        %p861 = pneg %p469
        %p862 = pneg %p466
        %s863 = sand.u32 %s456, 1
        %s864 = scalar_lea.sflag [#allocation4], %s863
        %s865 = sand.u32 %s456, 1
        %s866 = scalar_lea.vmem [#allocation29], %s865
        %v868 = vld [vmem:[%s732] sm:$0xff]
        %v869 = vld [vmem:[#allocation5] sm:$0xf]
        %v870 = vld [vmem:[#allocation5 + $0x4] sm:$0xf]
        %v871 = vpack.c.bf16 %v868, %v868
        %v872 = vld [vmem:[#allocation7] sm:$0x1]
        %v874 = vperm.slane %v872, 0
        %v878 = vunpack.c.l.b16 %v869
        %v879 = vunpack.c.l.b16 %v870
        %v880 = vpack.c.b16 %v879, %v878
        %vm882 = vcmask 130048
        %v884 = vsel %vm882, %v871, 0
        %886 = vmatpush.bf16.msra.mxu0 0
        %887 = vmatpush.bf16.msra.mxu0 0
        %888 = vmatpush.bf16.msra.mxu0 0
        %889 = vmatpush.bf16.msra.mxu0 0
        %890 = vmatpush.bf16.msra.mxu0 0
        %891 = vmatpush.bf16.msra.mxu0 0
        %892 = vmatpush.bf16.msra.mxu0 0
        %893 = vmatpush.bf16.msra.mxu0 %v880
        %894 = vmatmul.bf16.gmra.mxu0 %v884
        %v895 = vpop.f32.mrf.mxu0
        %v896 = vadd.f32 %v874, %v895
        %v897 = vpop.f32.mrf.mxu0
        %898 = vdwg.mxu0
        %v899 = vmax.f32 %v896, 0.0
        %v900 = vand.u32 2147483647, %v896
        %v901 = vsub.f32 0.0, %v900
        %v902 = vmul.f32 %v901, 1.442695
        %v903 = vpow.pop %v902
        %v904 = vadd.f32 %v903, 1.0
        %v905 = vlog2.pop %v904
        %v906 = vmul.f32 %v905, 0.6931472
        %v907 = vmul.f32 -0.5, %v903
        %v908 = vadd.f32 %v907, 1.0
        %v909 = vmul.f32 %v908, %v903
        %v910 = vand.u32 2147483647, %v903
        %vm911 = vcmp.lt.f32.partialorder %v910, 0.0004427343
        %v912 = vsel %vm911, %v909, %v906
        %v913 = vadd.f32 %v899, %v912
        %v914 = vtanh.pop %v913
        %v915 = vmul.f32 %v896, %v914
        %v916 = vld [vmem:[#allocation8] sm:$0xf]
        %v917 = vld [vmem:[#allocation8 + $0x4] sm:$0xf]
        %v918 = vld [vmem:[#allocation8 + $0x8] sm:$0xf]
        %v919 = vld [vmem:[#allocation8 + $0xc] sm:$0xf]
        %v920 = vpack.c.bf16 %v915, %v915
        %v921 = vld [vmem:[#allocation10] sm:$0x1]
        %v923 = vperm.slane %v921, 0
        %v929 = vunpack.c.l.b16 %v916
        %v930 = vunpack.c.l.b16 %v917
        %v931 = vunpack.c.l.b16 %v918
        %v932 = vunpack.c.l.b16 %v919
        %v933 = vpack.c.b16 %v930, %v929
        %v934 = vpack.c.b16 %v932, %v931
        %vm937 = vcmask 261120
        %v939 = vsel %vm937, %v920, 0
        %941 = vmatpush.bf16.msra.mxu0 0
        %942 = vmatpush.bf16.msra.mxu0 0
        %943 = vmatpush.bf16.msra.mxu0 0
        %944 = vmatpush.bf16.msra.mxu0 0
        %945 = vmatpush.bf16.msra.mxu0 0
        %946 = vmatpush.bf16.msra.mxu0 0
        %947 = vmatpush.bf16.msra.mxu0 %v934
        %948 = vmatpush.bf16.msra.mxu0 %v933
        %949 = vmatmul.bf16.gmra.mxu0 %v939
        %v950 = vpop.f32.mrf.mxu0
        %v951 = vadd.f32 %v923, %v950
        %v952 = vpop.f32.mrf.mxu0
        %953 = vdwg.mxu0
        %v954 = vmax.f32 %v951, 0.0
        %v955 = vand.u32 2147483647, %v951
        %v956 = vsub.f32 0.0, %v955
        %v957 = vmul.f32 %v956, 1.442695
        %v958 = vpow.pop %v957
        %v959 = vadd.f32 %v958, 1.0
        %v960 = vlog2.pop %v959
        %v961 = vmul.f32 %v960, 0.6931472
        %v962 = vmul.f32 -0.5, %v958
        %v963 = vadd.f32 %v962, 1.0
        %v964 = vmul.f32 %v963, %v958
        %v965 = vand.u32 2147483647, %v958
        %vm966 = vcmp.lt.f32.partialorder %v965, 0.0004427343
        %v967 = vsel %vm966, %v964, %v961
        %v968 = vadd.f32 %v954, %v967
        %v969 = vtanh.pop %v968
        %v970 = vmul.f32 %v951, %v969
        %v971 = vlaneseq
        %v972 = vshrl.u32 %v971, 7
        %v973 = vrot.slane %v970, 6
        %vm974 = vcmp.ge.s32.totalorder %v972, 2
        %v975 = vsel %vm974, %v973, 0.0
        %v976 = vpack.c.bf16 %v975, %v975
        %v977 = vld [vmem:[#allocation11] sm:$0xf]
        %v978 = vld [vmem:[#allocation11 + $0x4] sm:$0xf]
        %v979 = vld [vmem:[#allocation11 + $0x8] sm:$0xf]
        %v980 = vld [vmem:[#allocation11 + $0xc] sm:$0xf]
        %v981 = vld [vmem:[#allocation13] sm:$0xf]
        %v982 = vld [vmem:[#allocation13 + $0x4] sm:$0xf]
        %v983 = vld [vmem:[#allocation13 + $0x8] sm:$0xf]
        %v984 = vld [vmem:[#allocation13 + $0xc] sm:$0xf]
        %v985 = vrot.slane %v970, 7
        %vm986 = vcmp.ge.s32.totalorder %v972, 1
        %v987 = vsel %vm986, %v985, 0.0
        %v988 = vpack.c.bf16 %v987, %v987
        %s989 = scalar_lea.vmem [#allocation11], 16
        %v990 = vld [vmem:[%s989] sm:$0xf]
        %v991 = vld [vmem:[%s989 + $0x4] sm:$0xf]
        %v992 = vld [vmem:[%s989 + $0x8] sm:$0xf]
        %v993 = vld [vmem:[%s989 + $0xc] sm:$0xf]
        %v998 = vunpack.c.l.b16 %v990
        %v999 = vunpack.c.l.b16 %v991
        %v1000 = vunpack.c.l.b16 %v992
        %v1001 = vunpack.c.l.b16 %v993
        %v1002 = vpack.c.b16 %v999, %v998
        %v1003 = vpack.c.b16 %v1001, %v1000
        %v1007 = vsel %vm937, %v988, 0
        %1009 = vmatpush.bf16.msra.mxu0 0
        %1010 = vmatpush.bf16.msra.mxu0 0
        %1011 = vmatpush.bf16.msra.mxu0 0
        %1012 = vmatpush.bf16.msra.mxu0 0
        %1013 = vmatpush.bf16.msra.mxu0 0
        %1014 = vmatpush.bf16.msra.mxu0 0
        %1015 = vmatpush.bf16.msra.mxu0 %v1003
        %1016 = vmatpush.bf16.msra.mxu0 %v1002
        %1017 = vmatmul.bf16.gmra.mxu0 %v1007
        %v1018 = vpop.f32.mrf.mxu0
        %v1019 = vadd.f32 0.0, %v1018
        %v1020 = vpop.f32.mrf.mxu0
        %1021 = vdwg.mxu0
        %v1026 = vunpack.c.l.b16 %v977
        %v1027 = vunpack.c.l.b16 %v978
        %v1028 = vunpack.c.l.b16 %v979
        %v1029 = vunpack.c.l.b16 %v980
        %v1030 = vpack.c.b16 %v1027, %v1026
        %v1031 = vpack.c.b16 %v1029, %v1028
        %v1035 = vsel %vm937, %v976, 0
        %1037 = vmatpush.bf16.msra.mxu0 0
        %1038 = vmatpush.bf16.msra.mxu0 0
        %1039 = vmatpush.bf16.msra.mxu0 0
        %1040 = vmatpush.bf16.msra.mxu0 0
        %1041 = vmatpush.bf16.msra.mxu0 0
        %1042 = vmatpush.bf16.msra.mxu0 0
        %1043 = vmatpush.bf16.msra.mxu0 %v1031
        %1044 = vmatpush.bf16.msra.mxu0 %v1030
        %1045 = vmatmul.bf16.gmra.mxu0 %v1035
        %v1046 = vpop.f32.mrf.mxu0
        %v1047 = vadd.f32 %v1019, %v1046
        %v1048 = vpop.f32.mrf.mxu0
        %1049 = vdwg.mxu0
        %s1050 = scalar_lea.vmem [#allocation13], 16
        %v1051 = vld [vmem:[%s1050] sm:$0xf]
        %v1052 = vld [vmem:[%s1050 + $0x4] sm:$0xf]
        %v1053 = vld [vmem:[%s1050 + $0x8] sm:$0xf]
        %v1054 = vld [vmem:[%s1050 + $0xc] sm:$0xf]
        %v1059 = vunpack.c.l.b16 %v1051
        %v1060 = vunpack.c.l.b16 %v1052
        %v1061 = vunpack.c.l.b16 %v1053
        %v1062 = vunpack.c.l.b16 %v1054
        %v1063 = vpack.c.b16 %v1060, %v1059
        %v1064 = vpack.c.b16 %v1062, %v1061
        %1067 = vmatpush.bf16.msra.mxu0 0
        %1068 = vmatpush.bf16.msra.mxu0 0
        %1069 = vmatpush.bf16.msra.mxu0 0
        %1070 = vmatpush.bf16.msra.mxu0 0
        %1071 = vmatpush.bf16.msra.mxu0 0
        %1072 = vmatpush.bf16.msra.mxu0 0
        %1073 = vmatpush.bf16.msra.mxu0 %v1064
        %1074 = vmatpush.bf16.msra.mxu0 %v1063
        %1075 = vmatmul.bf16.gmra.mxu0 %v1007
        %v1076 = vpop.f32.mrf.mxu0
        %v1077 = vadd.f32 0.0, %v1076
        %v1078 = vpop.f32.mrf.mxu0
        %1079 = vdwg.mxu0
        %v1084 = vunpack.c.l.b16 %v981
        %v1085 = vunpack.c.l.b16 %v982
        %v1086 = vunpack.c.l.b16 %v983
        %v1087 = vunpack.c.l.b16 %v984
        %v1088 = vpack.c.b16 %v1085, %v1084
        %v1089 = vpack.c.b16 %v1087, %v1086
        %1092 = vmatpush.bf16.msra.mxu0 0
        %1093 = vmatpush.bf16.msra.mxu0 0
        %1094 = vmatpush.bf16.msra.mxu0 0
        %1095 = vmatpush.bf16.msra.mxu0 0
        %1096 = vmatpush.bf16.msra.mxu0 0
        %1097 = vmatpush.bf16.msra.mxu0 0
        %1098 = vmatpush.bf16.msra.mxu0 %v1089
        %1099 = vmatpush.bf16.msra.mxu0 %v1088
        %1100 = vmatmul.bf16.gmra.mxu0 %v1035
        %v1101 = vpop.f32.mrf.mxu0
        %v1102 = vadd.f32 %v1077, %v1101
        %v1103 = vpop.f32.mrf.mxu0
        %1104 = vdwg.mxu0
        %v1105 = vpack.c.bf16 %v970, %v970
        %s1106 = scalar_lea.vmem [#allocation11], 32
        %v1107 = vld [vmem:[%s1106] sm:$0xf]
        %v1108 = vld [vmem:[%s1106 + $0x4] sm:$0xf]
        %v1109 = vld [vmem:[%s1106 + $0x8] sm:$0xf]
        %v1110 = vld [vmem:[%s1106 + $0xc] sm:$0xf]
        %v1115 = vunpack.c.l.b16 %v1107
        %v1116 = vunpack.c.l.b16 %v1108
        %v1117 = vunpack.c.l.b16 %v1109
        %v1118 = vunpack.c.l.b16 %v1110
        %v1119 = vpack.c.b16 %v1116, %v1115
        %v1120 = vpack.c.b16 %v1118, %v1117
        %v1124 = vsel %vm937, %v1105, 0
        %1126 = vmatpush.bf16.msra.mxu0 0
        %1127 = vmatpush.bf16.msra.mxu0 0
        %1128 = vmatpush.bf16.msra.mxu0 0
        %1129 = vmatpush.bf16.msra.mxu0 0
        %1130 = vmatpush.bf16.msra.mxu0 0
        %1131 = vmatpush.bf16.msra.mxu0 0
        %1132 = vmatpush.bf16.msra.mxu0 %v1120
        %1133 = vmatpush.bf16.msra.mxu0 %v1119
        %1134 = vmatmul.bf16.gmra.mxu0 %v1124
        %v1135 = vpop.f32.mrf.mxu0
        %v1136 = vadd.f32 0.0, %v1135
        %v1137 = vpop.f32.mrf.mxu0
        %1138 = vdwg.mxu0
        %v1139 = vadd.f32 %v1047, %v1136
        %s1140 = scalar_lea.vmem [#allocation13], 32
        %v1141 = vld [vmem:[%s1140] sm:$0xf]
        %v1142 = vld [vmem:[%s1140 + $0x4] sm:$0xf]
        %v1143 = vld [vmem:[%s1140 + $0x8] sm:$0xf]
        %v1144 = vld [vmem:[%s1140 + $0xc] sm:$0xf]
        %v1149 = vunpack.c.l.b16 %v1141
        %v1150 = vunpack.c.l.b16 %v1142
        %v1151 = vunpack.c.l.b16 %v1143
        %v1152 = vunpack.c.l.b16 %v1144
        %v1153 = vpack.c.b16 %v1150, %v1149
        %v1154 = vpack.c.b16 %v1152, %v1151
        %1157 = vmatpush.bf16.msra.mxu0 0
        %1158 = vmatpush.bf16.msra.mxu0 0
        %1159 = vmatpush.bf16.msra.mxu0 0
        %1160 = vmatpush.bf16.msra.mxu0 0
        %1161 = vmatpush.bf16.msra.mxu0 0
        %1162 = vmatpush.bf16.msra.mxu0 0
        %1163 = vmatpush.bf16.msra.mxu0 %v1154
        %1164 = vmatpush.bf16.msra.mxu0 %v1153
        %1165 = vmatmul.bf16.gmra.mxu0 %v1124
        %v1166 = vpop.f32.mrf.mxu0
        %v1167 = vadd.f32 0.0, %v1166
        %v1168 = vpop.f32.mrf.mxu0
        %1169 = vdwg.mxu0
        %v1170 = vadd.f32 %v1102, %v1167
        %v1171 = vrot.slane %v970, 1
        %vm1172 = vcmp.lt.s32.totalorder %v972, 7
        %v1173 = vsel %vm1172, %v1171, 0.0
        %v1174 = vpack.c.bf16 %v1173, %v1173
        %s1175 = scalar_lea.vmem [#allocation11], 48
        %v1176 = vld [vmem:[%s1175] sm:$0xf]
        %v1177 = vld [vmem:[%s1175 + $0x4] sm:$0xf]
        %v1178 = vld [vmem:[%s1175 + $0x8] sm:$0xf]
        %v1179 = vld [vmem:[%s1175 + $0xc] sm:$0xf]
        %v1184 = vunpack.c.l.b16 %v1176
        %v1185 = vunpack.c.l.b16 %v1177
        %v1186 = vunpack.c.l.b16 %v1178
        %v1187 = vunpack.c.l.b16 %v1179
        %v1188 = vpack.c.b16 %v1185, %v1184
        %v1189 = vpack.c.b16 %v1187, %v1186
        %v1193 = vsel %vm937, %v1174, 0
        %1195 = vmatpush.bf16.msra.mxu0 0
        %1196 = vmatpush.bf16.msra.mxu0 0
        %1197 = vmatpush.bf16.msra.mxu0 0
        %1198 = vmatpush.bf16.msra.mxu0 0
        %1199 = vmatpush.bf16.msra.mxu0 0
        %1200 = vmatpush.bf16.msra.mxu0 0
        %1201 = vmatpush.bf16.msra.mxu0 %v1189
        %1202 = vmatpush.bf16.msra.mxu0 %v1188
        %1203 = vmatmul.bf16.gmra.mxu0 %v1193
        %v1204 = vpop.f32.mrf.mxu0
        %v1205 = vadd.f32 0.0, %v1204
        %v1206 = vpop.f32.mrf.mxu0
        %1207 = vdwg.mxu0
        %v1208 = vadd.f32 %v1139, %v1205
        %s1209 = scalar_lea.vmem [#allocation13], 48
        %v1210 = vld [vmem:[%s1209] sm:$0xf]
        %v1211 = vld [vmem:[%s1209 + $0x4] sm:$0xf]
        %v1212 = vld [vmem:[%s1209 + $0x8] sm:$0xf]
        %v1213 = vld [vmem:[%s1209 + $0xc] sm:$0xf]
        %v1218 = vunpack.c.l.b16 %v1210
        %v1219 = vunpack.c.l.b16 %v1211
        %v1220 = vunpack.c.l.b16 %v1212
        %v1221 = vunpack.c.l.b16 %v1213
        %v1222 = vpack.c.b16 %v1219, %v1218
        %v1223 = vpack.c.b16 %v1221, %v1220
        %1226 = vmatpush.bf16.msra.mxu0 0
        %1227 = vmatpush.bf16.msra.mxu0 0
        %1228 = vmatpush.bf16.msra.mxu0 0
        %1229 = vmatpush.bf16.msra.mxu0 0
        %1230 = vmatpush.bf16.msra.mxu0 0
        %1231 = vmatpush.bf16.msra.mxu0 0
        %1232 = vmatpush.bf16.msra.mxu0 %v1223
        %1233 = vmatpush.bf16.msra.mxu0 %v1222
        %1234 = vmatmul.bf16.gmra.mxu0 %v1193
        %v1235 = vpop.f32.mrf.mxu0
        %v1236 = vadd.f32 0.0, %v1235
        %v1237 = vpop.f32.mrf.mxu0
        %1238 = vdwg.mxu0
        %v1239 = vadd.f32 %v1170, %v1236
        %v1240 = vrot.slane %v970, 2
        %vm1241 = vcmp.lt.s32.totalorder %v972, 6
        %v1242 = vsel %vm1241, %v1240, 0.0
        %v1243 = vpack.c.bf16 %v1242, %v1242
        %s1244 = scalar_lea.vmem [#allocation11], 64
        %v1245 = vld [vmem:[%s1244] sm:$0xf]
        %v1246 = vld [vmem:[%s1244 + $0x4] sm:$0xf]
        %v1247 = vld [vmem:[%s1244 + $0x8] sm:$0xf]
        %v1248 = vld [vmem:[%s1244 + $0xc] sm:$0xf]
        %v1253 = vunpack.c.l.b16 %v1245
        %v1254 = vunpack.c.l.b16 %v1246
        %v1255 = vunpack.c.l.b16 %v1247
        %v1256 = vunpack.c.l.b16 %v1248
        %v1257 = vpack.c.b16 %v1254, %v1253
        %v1258 = vpack.c.b16 %v1256, %v1255
        %v1262 = vsel %vm937, %v1243, 0
        %1264 = vmatpush.bf16.msra.mxu0 0
        %1265 = vmatpush.bf16.msra.mxu0 0
        %1266 = vmatpush.bf16.msra.mxu0 0
        %1267 = vmatpush.bf16.msra.mxu0 0
        %1268 = vmatpush.bf16.msra.mxu0 0
        %1269 = vmatpush.bf16.msra.mxu0 0
        %1270 = vmatpush.bf16.msra.mxu0 %v1258
        %1271 = vmatpush.bf16.msra.mxu0 %v1257
        %1272 = vmatmul.bf16.gmra.mxu0 %v1262
        %v1273 = vpop.f32.mrf.mxu0
        %v1274 = vadd.f32 0.0, %v1273
        %v1275 = vpop.f32.mrf.mxu0
        %1276 = vdwg.mxu0
        %v1277 = vadd.f32 %v1208, %v1274
        %s1278 = scalar_lea.vmem [#allocation13], 64
        %v1279 = vld [vmem:[%s1278] sm:$0xf]
        %v1280 = vld [vmem:[%s1278 + $0x4] sm:$0xf]
        %v1281 = vld [vmem:[%s1278 + $0x8] sm:$0xf]
        %v1282 = vld [vmem:[%s1278 + $0xc] sm:$0xf]
        %v1287 = vunpack.c.l.b16 %v1279
        %v1288 = vunpack.c.l.b16 %v1280
        %v1289 = vunpack.c.l.b16 %v1281
        %v1290 = vunpack.c.l.b16 %v1282
        %v1291 = vpack.c.b16 %v1288, %v1287
        %v1292 = vpack.c.b16 %v1290, %v1289
        %1295 = vmatpush.bf16.msra.mxu0 0
        %1296 = vmatpush.bf16.msra.mxu0 0
        %1297 = vmatpush.bf16.msra.mxu0 0
        %1298 = vmatpush.bf16.msra.mxu0 0
        %1299 = vmatpush.bf16.msra.mxu0 0
        %1300 = vmatpush.bf16.msra.mxu0 0
        %1301 = vmatpush.bf16.msra.mxu0 %v1292
        %1302 = vmatpush.bf16.msra.mxu0 %v1291
        %1303 = vmatmul.bf16.gmra.mxu0 %v1262
        %v1304 = vpop.f32.mrf.mxu0
        %v1305 = vadd.f32 0.0, %v1304
        %v1306 = vpop.f32.mrf.mxu0
        %1307 = vdwg.mxu0
        %v1308 = vadd.f32 %v1239, %v1305
        %v1309 = vld [vmem:[#allocation14] sm:$0x1]
        %v1311 = vperm.slane %v1309, 0
        %v1313 = vadd.f32 %v1277, %v1311
        %v1314 = vld [vmem:[#allocation16] sm:$0x1]
        %v1316 = vperm.slane %v1314, 0
        %v1318 = vadd.f32 %v1308, %v1316
        %v1319 = vmul.f32 %v1318, 0.5
        %v1320 = vtanh.pop %v1319
        %v1321 = vadd.f32 %v1320, 1.0
        %v1322 = vmul.f32 %v1321, 0.5
        %v1323 = vmul.f32 %v1313, %v1322
        %v1324 = vadd.f32 %v970, %v1323
        %v1325 = vrot.slane %v1324, 6
        %v1326 = vsel %vm974, %v1325, 0.0
        %v1327 = vpack.c.bf16 %v1326, %v1326
        %v1328 = vld [vmem:[#allocation17] sm:$0xf]
        %v1329 = vld [vmem:[#allocation17 + $0x4] sm:$0xf]
        %v1330 = vld [vmem:[#allocation17 + $0x8] sm:$0xf]
        %v1331 = vld [vmem:[#allocation17 + $0xc] sm:$0xf]
        %v1332 = vld [vmem:[#allocation19] sm:$0xf]
        %v1333 = vld [vmem:[#allocation19 + $0x4] sm:$0xf]
        %v1334 = vld [vmem:[#allocation19 + $0x8] sm:$0xf]
        %v1335 = vld [vmem:[#allocation19 + $0xc] sm:$0xf]
        %v1336 = vrot.slane %v1324, 7
        %v1337 = vsel %vm986, %v1336, 0.0
        %v1338 = vpack.c.bf16 %v1337, %v1337
        %s1339 = scalar_lea.vmem [#allocation17], 16
        %v1340 = vld [vmem:[%s1339] sm:$0xf]
        %v1341 = vld [vmem:[%s1339 + $0x4] sm:$0xf]
        %v1342 = vld [vmem:[%s1339 + $0x8] sm:$0xf]
        %v1343 = vld [vmem:[%s1339 + $0xc] sm:$0xf]
        %v1348 = vunpack.c.l.b16 %v1340
        %v1349 = vunpack.c.l.b16 %v1341
        %v1350 = vunpack.c.l.b16 %v1342
        %v1351 = vunpack.c.l.b16 %v1343
        %v1352 = vpack.c.b16 %v1349, %v1348
        %v1353 = vpack.c.b16 %v1351, %v1350
        %v1357 = vsel %vm937, %v1338, 0
        %1359 = vmatpush.bf16.msra.mxu0 0
        %1360 = vmatpush.bf16.msra.mxu0 0
        %1361 = vmatpush.bf16.msra.mxu0 0
        %1362 = vmatpush.bf16.msra.mxu0 0
        %1363 = vmatpush.bf16.msra.mxu0 0
        %1364 = vmatpush.bf16.msra.mxu0 0
        %1365 = vmatpush.bf16.msra.mxu0 %v1353
        %1366 = vmatpush.bf16.msra.mxu0 %v1352
        %1367 = vmatmul.bf16.gmra.mxu0 %v1357
        %v1368 = vpop.f32.mrf.mxu0
        %v1369 = vadd.f32 0.0, %v1368
        %v1370 = vpop.f32.mrf.mxu0
        %1371 = vdwg.mxu0
        %v1376 = vunpack.c.l.b16 %v1328
        %v1377 = vunpack.c.l.b16 %v1329
        %v1378 = vunpack.c.l.b16 %v1330
        %v1379 = vunpack.c.l.b16 %v1331
        %v1380 = vpack.c.b16 %v1377, %v1376
        %v1381 = vpack.c.b16 %v1379, %v1378
        %v1385 = vsel %vm937, %v1327, 0
        %1387 = vmatpush.bf16.msra.mxu0 0
        %1388 = vmatpush.bf16.msra.mxu0 0
        %1389 = vmatpush.bf16.msra.mxu0 0
        %1390 = vmatpush.bf16.msra.mxu0 0
        %1391 = vmatpush.bf16.msra.mxu0 0
        %1392 = vmatpush.bf16.msra.mxu0 0
        %1393 = vmatpush.bf16.msra.mxu0 %v1381
        %1394 = vmatpush.bf16.msra.mxu0 %v1380
        %1395 = vmatmul.bf16.gmra.mxu0 %v1385
        %v1396 = vpop.f32.mrf.mxu0
        %v1397 = vadd.f32 %v1369, %v1396
        %v1398 = vpop.f32.mrf.mxu0
        %1399 = vdwg.mxu0
        %s1400 = scalar_lea.vmem [#allocation19], 16
        %v1401 = vld [vmem:[%s1400] sm:$0xf]
        %v1402 = vld [vmem:[%s1400 + $0x4] sm:$0xf]
        %v1403 = vld [vmem:[%s1400 + $0x8] sm:$0xf]
        %v1404 = vld [vmem:[%s1400 + $0xc] sm:$0xf]
        %v1409 = vunpack.c.l.b16 %v1401
        %v1410 = vunpack.c.l.b16 %v1402
        %v1411 = vunpack.c.l.b16 %v1403
        %v1412 = vunpack.c.l.b16 %v1404
        %v1413 = vpack.c.b16 %v1410, %v1409
        %v1414 = vpack.c.b16 %v1412, %v1411
        %1417 = vmatpush.bf16.msra.mxu0 0
        %1418 = vmatpush.bf16.msra.mxu0 0
        %1419 = vmatpush.bf16.msra.mxu0 0
        %1420 = vmatpush.bf16.msra.mxu0 0
        %1421 = vmatpush.bf16.msra.mxu0 0
        %1422 = vmatpush.bf16.msra.mxu0 0
        %1423 = vmatpush.bf16.msra.mxu0 %v1414
        %1424 = vmatpush.bf16.msra.mxu0 %v1413
        %1425 = vmatmul.bf16.gmra.mxu0 %v1357
        %v1426 = vpop.f32.mrf.mxu0
        %v1427 = vadd.f32 0.0, %v1426
        %v1428 = vpop.f32.mrf.mxu0
        %1429 = vdwg.mxu0
        %v1434 = vunpack.c.l.b16 %v1332
        %v1435 = vunpack.c.l.b16 %v1333
        %v1436 = vunpack.c.l.b16 %v1334
        %v1437 = vunpack.c.l.b16 %v1335
        %v1438 = vpack.c.b16 %v1435, %v1434
        %v1439 = vpack.c.b16 %v1437, %v1436
        %1442 = vmatpush.bf16.msra.mxu0 0
        %1443 = vmatpush.bf16.msra.mxu0 0
        %1444 = vmatpush.bf16.msra.mxu0 0
        %1445 = vmatpush.bf16.msra.mxu0 0
        %1446 = vmatpush.bf16.msra.mxu0 0
        %1447 = vmatpush.bf16.msra.mxu0 0
        %1448 = vmatpush.bf16.msra.mxu0 %v1439
        %1449 = vmatpush.bf16.msra.mxu0 %v1438
        %1450 = vmatmul.bf16.gmra.mxu0 %v1385
        %v1451 = vpop.f32.mrf.mxu0
        %v1452 = vadd.f32 %v1427, %v1451
        %v1453 = vpop.f32.mrf.mxu0
        %1454 = vdwg.mxu0
        %v1455 = vpack.c.bf16 %v1324, %v1324
        %s1456 = scalar_lea.vmem [#allocation17], 32
        %v1457 = vld [vmem:[%s1456] sm:$0xf]
        %v1458 = vld [vmem:[%s1456 + $0x4] sm:$0xf]
        %v1459 = vld [vmem:[%s1456 + $0x8] sm:$0xf]
        %v1460 = vld [vmem:[%s1456 + $0xc] sm:$0xf]
        %v1465 = vunpack.c.l.b16 %v1457
        %v1466 = vunpack.c.l.b16 %v1458
        %v1467 = vunpack.c.l.b16 %v1459
        %v1468 = vunpack.c.l.b16 %v1460
        %v1469 = vpack.c.b16 %v1466, %v1465
        %v1470 = vpack.c.b16 %v1468, %v1467
        %v1474 = vsel %vm937, %v1455, 0
        %1476 = vmatpush.bf16.msra.mxu0 0
        %1477 = vmatpush.bf16.msra.mxu0 0
        %1478 = vmatpush.bf16.msra.mxu0 0
        %1479 = vmatpush.bf16.msra.mxu0 0
        %1480 = vmatpush.bf16.msra.mxu0 0
        %1481 = vmatpush.bf16.msra.mxu0 0
        %1482 = vmatpush.bf16.msra.mxu0 %v1470
        %1483 = vmatpush.bf16.msra.mxu0 %v1469
        %1484 = vmatmul.bf16.gmra.mxu0 %v1474
        %v1485 = vpop.f32.mrf.mxu0
        %v1486 = vadd.f32 0.0, %v1485
        %v1487 = vpop.f32.mrf.mxu0
        %1488 = vdwg.mxu0
        %v1489 = vadd.f32 %v1397, %v1486
        %s1490 = scalar_lea.vmem [#allocation19], 32
        %v1491 = vld [vmem:[%s1490] sm:$0xf]
        %v1492 = vld [vmem:[%s1490 + $0x4] sm:$0xf]
        %v1493 = vld [vmem:[%s1490 + $0x8] sm:$0xf]
        %v1494 = vld [vmem:[%s1490 + $0xc] sm:$0xf]
        %v1499 = vunpack.c.l.b16 %v1491
        %v1500 = vunpack.c.l.b16 %v1492
        %v1501 = vunpack.c.l.b16 %v1493
        %v1502 = vunpack.c.l.b16 %v1494
        %v1503 = vpack.c.b16 %v1500, %v1499
        %v1504 = vpack.c.b16 %v1502, %v1501
        %1507 = vmatpush.bf16.msra.mxu0 0
        %1508 = vmatpush.bf16.msra.mxu0 0
        %1509 = vmatpush.bf16.msra.mxu0 0
        %1510 = vmatpush.bf16.msra.mxu0 0
        %1511 = vmatpush.bf16.msra.mxu0 0
        %1512 = vmatpush.bf16.msra.mxu0 0
        %1513 = vmatpush.bf16.msra.mxu0 %v1504
        %1514 = vmatpush.bf16.msra.mxu0 %v1503
        %1515 = vmatmul.bf16.gmra.mxu0 %v1474
        %v1516 = vpop.f32.mrf.mxu0
        %v1517 = vadd.f32 0.0, %v1516
        %v1518 = vpop.f32.mrf.mxu0
        %1519 = vdwg.mxu0
        %v1520 = vadd.f32 %v1452, %v1517
        %v1521 = vrot.slane %v1324, 1
        %v1522 = vsel %vm1172, %v1521, 0.0
        %v1523 = vpack.c.bf16 %v1522, %v1522
        %s1524 = scalar_lea.vmem [#allocation17], 48
        %v1525 = vld [vmem:[%s1524] sm:$0xf]
        %v1526 = vld [vmem:[%s1524 + $0x4] sm:$0xf]
        %v1527 = vld [vmem:[%s1524 + $0x8] sm:$0xf]
        %v1528 = vld [vmem:[%s1524 + $0xc] sm:$0xf]
        %v1533 = vunpack.c.l.b16 %v1525
        %v1534 = vunpack.c.l.b16 %v1526
        %v1535 = vunpack.c.l.b16 %v1527
        %v1536 = vunpack.c.l.b16 %v1528
        %v1537 = vpack.c.b16 %v1534, %v1533
        %v1538 = vpack.c.b16 %v1536, %v1535
        %v1542 = vsel %vm937, %v1523, 0
        %1544 = vmatpush.bf16.msra.mxu0 0
        %1545 = vmatpush.bf16.msra.mxu0 0
        %1546 = vmatpush.bf16.msra.mxu0 0
        %1547 = vmatpush.bf16.msra.mxu0 0
        %1548 = vmatpush.bf16.msra.mxu0 0
        %1549 = vmatpush.bf16.msra.mxu0 0
        %1550 = vmatpush.bf16.msra.mxu0 %v1538
        %1551 = vmatpush.bf16.msra.mxu0 %v1537
        %1552 = vmatmul.bf16.gmra.mxu0 %v1542
        %v1553 = vpop.f32.mrf.mxu0
        %v1554 = vadd.f32 0.0, %v1553
        %v1555 = vpop.f32.mrf.mxu0
        %1556 = vdwg.mxu0
        %v1557 = vadd.f32 %v1489, %v1554
        %s1558 = scalar_lea.vmem [#allocation19], 48
        %v1559 = vld [vmem:[%s1558] sm:$0xf]
        %v1560 = vld [vmem:[%s1558 + $0x4] sm:$0xf]
        %v1561 = vld [vmem:[%s1558 + $0x8] sm:$0xf]
        %v1562 = vld [vmem:[%s1558 + $0xc] sm:$0xf]
        %v1567 = vunpack.c.l.b16 %v1559
        %v1568 = vunpack.c.l.b16 %v1560
        %v1569 = vunpack.c.l.b16 %v1561
        %v1570 = vunpack.c.l.b16 %v1562
        %v1571 = vpack.c.b16 %v1568, %v1567
        %v1572 = vpack.c.b16 %v1570, %v1569
        %1575 = vmatpush.bf16.msra.mxu0 0
        %1576 = vmatpush.bf16.msra.mxu0 0
        %1577 = vmatpush.bf16.msra.mxu0 0
        %1578 = vmatpush.bf16.msra.mxu0 0
        %1579 = vmatpush.bf16.msra.mxu0 0
        %1580 = vmatpush.bf16.msra.mxu0 0
        %1581 = vmatpush.bf16.msra.mxu0 %v1572
        %1582 = vmatpush.bf16.msra.mxu0 %v1571
        %1583 = vmatmul.bf16.gmra.mxu0 %v1542
        %v1584 = vpop.f32.mrf.mxu0
        %v1585 = vadd.f32 0.0, %v1584
        %v1586 = vpop.f32.mrf.mxu0
        %1587 = vdwg.mxu0
        %v1588 = vadd.f32 %v1520, %v1585
        %v1589 = vrot.slane %v1324, 2
        %v1590 = vsel %vm1241, %v1589, 0.0
        %v1591 = vpack.c.bf16 %v1590, %v1590
        %s1592 = scalar_lea.vmem [#allocation17], 64
        %v1593 = vld [vmem:[%s1592] sm:$0xf]
        %v1594 = vld [vmem:[%s1592 + $0x4] sm:$0xf]
        %v1595 = vld [vmem:[%s1592 + $0x8] sm:$0xf]
        %v1596 = vld [vmem:[%s1592 + $0xc] sm:$0xf]
        %v1601 = vunpack.c.l.b16 %v1593
        %v1602 = vunpack.c.l.b16 %v1594
        %v1603 = vunpack.c.l.b16 %v1595
        %v1604 = vunpack.c.l.b16 %v1596
        %v1605 = vpack.c.b16 %v1602, %v1601
        %v1606 = vpack.c.b16 %v1604, %v1603
        %v1610 = vsel %vm937, %v1591, 0
        %1612 = vmatpush.bf16.msra.mxu0 0
        %1613 = vmatpush.bf16.msra.mxu0 0
        %1614 = vmatpush.bf16.msra.mxu0 0
        %1615 = vmatpush.bf16.msra.mxu0 0
        %1616 = vmatpush.bf16.msra.mxu0 0
        %1617 = vmatpush.bf16.msra.mxu0 0
        %1618 = vmatpush.bf16.msra.mxu0 %v1606
        %1619 = vmatpush.bf16.msra.mxu0 %v1605
        %1620 = vmatmul.bf16.gmra.mxu0 %v1610
        %v1621 = vpop.f32.mrf.mxu0
        %v1622 = vadd.f32 0.0, %v1621
        %v1623 = vpop.f32.mrf.mxu0
        %1624 = vdwg.mxu0
        %v1625 = vadd.f32 %v1557, %v1622
        %s1626 = scalar_lea.vmem [#allocation19], 64
        %v1627 = vld [vmem:[%s1626] sm:$0xf]
        %v1628 = vld [vmem:[%s1626 + $0x4] sm:$0xf]
        %v1629 = vld [vmem:[%s1626 + $0x8] sm:$0xf]
        %v1630 = vld [vmem:[%s1626 + $0xc] sm:$0xf]
        %v1635 = vunpack.c.l.b16 %v1627
        %v1636 = vunpack.c.l.b16 %v1628
        %v1637 = vunpack.c.l.b16 %v1629
        %v1638 = vunpack.c.l.b16 %v1630
        %v1639 = vpack.c.b16 %v1636, %v1635
        %v1640 = vpack.c.b16 %v1638, %v1637
        %1643 = vmatpush.bf16.msra.mxu0 0
        %1644 = vmatpush.bf16.msra.mxu0 0
        %1645 = vmatpush.bf16.msra.mxu0 0
        %1646 = vmatpush.bf16.msra.mxu0 0
        %1647 = vmatpush.bf16.msra.mxu0 0
        %1648 = vmatpush.bf16.msra.mxu0 0
        %1649 = vmatpush.bf16.msra.mxu0 %v1640
        %1650 = vmatpush.bf16.msra.mxu0 %v1639
        %1651 = vmatmul.bf16.gmra.mxu0 %v1610
        %v1652 = vpop.f32.mrf.mxu0
        %v1653 = vadd.f32 0.0, %v1652
        %v1654 = vpop.f32.mrf.mxu0
        %1655 = vdwg.mxu0
        %v1656 = vadd.f32 %v1588, %v1653
        %v1657 = vld [vmem:[#allocation20] sm:$0x1]
        %v1659 = vperm.slane %v1657, 0
        %v1661 = vadd.f32 %v1625, %v1659
        %v1662 = vld [vmem:[#allocation22] sm:$0x1]
        %v1664 = vperm.slane %v1662, 0
        %v1666 = vadd.f32 %v1656, %v1664
        %v1667 = vmul.f32 %v1666, 0.5
        %v1668 = vtanh.pop %v1667
        %v1669 = vadd.f32 %v1668, 1.0
        %v1670 = vmul.f32 %v1669, 0.5
        %v1671 = vmul.f32 %v1661, %v1670
        %v1672 = vadd.f32 %v1324, %v1671
        %v1673 = vld [vmem:[#allocation23] sm:$0xf]
        %v1674 = vld [vmem:[#allocation23 + $0x4] sm:$0xf]
        %v1675 = vld [vmem:[#allocation23 + $0x8] sm:$0xf]
        %v1676 = vld [vmem:[#allocation23 + $0xc] sm:$0xf]
        %v1677 = vpack.c.bf16 %v1672, %v1672
        %v1678 = vld [vmem:[#allocation25] sm:$0x1]
        %v1680 = vperm.slane %v1678, 0
        %v1686 = vunpack.c.l.b16 %v1673
        %v1687 = vunpack.c.l.b16 %v1674
        %v1688 = vunpack.c.l.b16 %v1675
        %v1689 = vunpack.c.l.b16 %v1676
        %v1690 = vpack.c.b16 %v1687, %v1686
        %v1691 = vpack.c.b16 %v1689, %v1688
        %v1695 = vsel %vm937, %v1677, 0
        %1697 = vmatpush.bf16.msra.mxu0 0
        %1698 = vmatpush.bf16.msra.mxu0 0
        %1699 = vmatpush.bf16.msra.mxu0 0
        %1700 = vmatpush.bf16.msra.mxu0 0
        %1701 = vmatpush.bf16.msra.mxu0 0
        %1702 = vmatpush.bf16.msra.mxu0 0
        %1703 = vmatpush.bf16.msra.mxu0 %v1691
        %1704 = vmatpush.bf16.msra.mxu0 %v1690
        %1705 = vmatmul.bf16.gmra.mxu0 %v1695
        %v1706 = vpop.f32.mrf.mxu0
        %v1707 = vadd.f32 %v1680, %v1706
        %v1708 = vpop.f32.mrf.mxu0
        %1709 = vdwg.mxu0
        %v1710 = vmul.f32 %v1707, 0.17677669
        %v1711 = vld [vmem:[#allocation26] sm:$0xf]
        %v1712 = vld [vmem:[#allocation26 + $0x4] sm:$0xf]
        %v1713 = vld [vmem:[#allocation26 + $0x8] sm:$0xf]
        %v1714 = vld [vmem:[#allocation26 + $0xc] sm:$0xf]
        %v1715 = vld [vmem:[#allocation28] sm:$0x1]
        %v1717 = vperm.slane %v1715, 0
        %v1719 = vadd.f32 %v1672, %v1717
        %v1720 = vpack.c.bf16 %v1710, %v1710
        %v1721 = vpack.c.bf16 %v1707, %v1707
        %1723 = vrot.lane.b32.xlu0 %v1721, 96
        %v1724 = vpop.permute.xlu0 %1723
        %v1726 = vsel %vm882, %v1720, 0
        %v1729 = vsel %vm882, %v1724, 0
        %1731 = vmatpush.bf16.xpose.msra.mxu0 0
        %1732 = vmatpush.bf16.xpose.msra.mxu0 0
        %1733 = vmatpush.bf16.xpose.msra.mxu0 0
        %1734 = vmatpush.bf16.xpose.msra.mxu0 0
        %1735 = vmatpush.bf16.xpose.msra.mxu0 0
        %1736 = vmatpush.bf16.xpose.msra.mxu0 0
        %1737 = vmatpush.bf16.xpose.msra.mxu0 0
        %1738 = vmatpush.bf16.xpose.msra.mxu0 %v1729
        %1739 = vmatmul.bf16.gmra.mxu0 %v1726
        %v1740 = vpop.f32.mrf.mxu0
        %v1741 = vadd.f32 0.0, %v1740
        %v1742 = vpop.f32.mrf.mxu0
        %1743 = vdwg.mxu0
        %vm1744 = vcmask 64512
        %v1745 = vsel %vm1744, %v1741, -inf
        %1746 = vmax.xlane.f32.xlu0 %v1745
        %v1747 = vpop.xlane.xlu0 %1746
        %v1748 = vsub.f32 %v1741, %v1747
        %v1749 = vmul.f32 %v1748, 1.442695
        %v1750 = vpow.pop %v1749
        %v1751 = vsel %vm1744, %v1750, 0.0
        %1752 = vadd.xlane.f32.xlu0 %v1751
        %v1753 = vpop.xlane.xlu0 %1752
        %v1754 = vrcp.pop %v1753
        %v1755 = vmul.f32 %v1750, %v1754
        %v1756 = vpack.c.bf16 %v1755, %v1755
        %1757 = vrot.lane.b32.xlu0 %v1721, 64
        %v1758 = vpop.permute.xlu0 %1757
        %v1760 = vsel %vm1744, %v1756, 0
        %vm1762 = vcmask 1043456
        %v1764 = vsel %vm1762, %v1758, 0
        %1766 = vmatpush.bf16.msra.mxu0 0
        %1767 = vmatpush.bf16.msra.mxu0 0
        %1768 = vmatpush.bf16.msra.mxu0 0
        %1769 = vmatpush.bf16.msra.mxu0 0
        %1770 = vmatpush.bf16.msra.mxu0 0
        %1771 = vmatpush.bf16.msra.mxu0 0
        %1772 = vmatpush.bf16.msra.mxu0 0
        %1773 = vmatpush.bf16.msra.mxu0 %v1764
        %1774 = vmatmul.bf16.gmra.mxu0 %v1760
        %v1775 = vpop.f32.mrf.mxu0
        %v1776 = vadd.f32 0.0, %v1775
        %v1777 = vpop.f32.mrf.mxu0
        %1778 = vdwg.mxu0
        %v1779 = vpack.c.bf16 %v1776, %v1776
        %v1782 = vunpack.c.l.b16 %v1711
        %v1783 = vunpack.c.l.b16 %v1712
        %v1784 = vpack.c.b16 %v1783, %v1782
        %v1787 = vsel %vm882, %v1779, 0
        %1789 = vmatpush.bf16.msra.mxu0 0
        %1790 = vmatpush.bf16.msra.mxu0 0
        %1791 = vmatpush.bf16.msra.mxu0 0
        %1792 = vmatpush.bf16.msra.mxu0 0
        %1793 = vmatpush.bf16.msra.mxu0 0
        %1794 = vmatpush.bf16.msra.mxu0 0
        %1795 = vmatpush.bf16.msra.mxu0 0
        %1796 = vmatpush.bf16.msra.mxu0 %v1784
        %1797 = vmatmul.bf16.gmra.mxu0 %v1787
        %v1798 = vpop.f32.mrf.mxu0
        %v1799 = vadd.f32 0.0, %v1798
        %v1800 = vpop.f32.mrf.mxu0
        %1801 = vdwg.mxu0
        %v1802 = vadd.f32 %v1719, %v1799
        %1804 = vrot.lane.b32.xlu0 %v1720, 112
        %v1805 = vpop.permute.xlu0 %1804
        %1806 = vrot.lane.b32.xlu0 %v1721, 80
        %v1807 = vpop.permute.xlu0 %1806
        %v1809 = vsel %vm882, %v1805, 0
        %v1812 = vsel %vm882, %v1807, 0
        %1814 = vmatpush.bf16.xpose.msra.mxu0 0
        %1815 = vmatpush.bf16.xpose.msra.mxu0 0
        %1816 = vmatpush.bf16.xpose.msra.mxu0 0
        %1817 = vmatpush.bf16.xpose.msra.mxu0 0
        %1818 = vmatpush.bf16.xpose.msra.mxu0 0
        %1819 = vmatpush.bf16.xpose.msra.mxu0 0
        %1820 = vmatpush.bf16.xpose.msra.mxu0 0
        %1821 = vmatpush.bf16.xpose.msra.mxu0 %v1812
        %1822 = vmatmul.bf16.gmra.mxu0 %v1809
        %v1823 = vpop.f32.mrf.mxu0
        %v1824 = vadd.f32 0.0, %v1823
        %v1825 = vpop.f32.mrf.mxu0
        %1826 = vdwg.mxu0
        %v1827 = vsel %vm1744, %v1824, -inf
        %1828 = vmax.xlane.f32.xlu0 %v1827
        %v1829 = vpop.xlane.xlu0 %1828
        %v1830 = vsub.f32 %v1824, %v1829
        %v1831 = vmul.f32 %v1830, 1.442695
        %v1832 = vpow.pop %v1831
        %v1833 = vsel %vm1744, %v1832, 0.0
        %1834 = vadd.xlane.f32.xlu0 %v1833
        %v1835 = vpop.xlane.xlu0 %1834
        %v1836 = vrcp.pop %v1835
        %v1837 = vmul.f32 %v1832, %v1836
        %v1838 = vpack.c.bf16 %v1837, %v1837
        %1839 = vrot.lane.b32.xlu0 %v1721, 48
        %v1840 = vpop.permute.xlu0 %1839
        %v1842 = vsel %vm1744, %v1838, 0
        %v1845 = vsel %vm1762, %v1840, 0
        %1847 = vmatpush.bf16.msra.mxu0 0
        %1848 = vmatpush.bf16.msra.mxu0 0
        %1849 = vmatpush.bf16.msra.mxu0 0
        %1850 = vmatpush.bf16.msra.mxu0 0
        %1851 = vmatpush.bf16.msra.mxu0 0
        %1852 = vmatpush.bf16.msra.mxu0 0
        %1853 = vmatpush.bf16.msra.mxu0 0
        %1854 = vmatpush.bf16.msra.mxu0 %v1845
        %1855 = vmatmul.bf16.gmra.mxu0 %v1842
        %v1856 = vpop.f32.mrf.mxu0
        %v1857 = vadd.f32 0.0, %v1856
        %v1858 = vpop.f32.mrf.mxu0
        %1859 = vdwg.mxu0
        %v1860 = vpack.c.bf16 %v1857, %v1857
        %v1863 = vunpack.c.l.b16 %v1713
        %v1864 = vunpack.c.l.b16 %v1714
        %v1865 = vpack.c.b16 %v1864, %v1863
        %v1868 = vsel %vm882, %v1860, 0
        %1870 = vmatpush.bf16.msra.mxu0 0
        %1871 = vmatpush.bf16.msra.mxu0 0
        %1872 = vmatpush.bf16.msra.mxu0 0
        %1873 = vmatpush.bf16.msra.mxu0 0
        %1874 = vmatpush.bf16.msra.mxu0 0
        %1875 = vmatpush.bf16.msra.mxu0 0
        %1876 = vmatpush.bf16.msra.mxu0 0
        %1877 = vmatpush.bf16.msra.mxu0 %v1865
        %1878 = vmatmul.bf16.gmra.mxu0 %v1868
        %v1879 = vpop.f32.mrf.mxu0
        %v1880 = vadd.f32 0.0, %v1879
        %v1881 = vpop.f32.mrf.mxu0
        %1882 = vdwg.mxu0
        %v1883 = vadd.f32 %v1802, %v1880
        %v1884 = vsel %vm937, %v1883, 0.0
        %v1885 = vrot.slane %v1884, 4
        %v1886 = vadd.f32 %v1884, %v1885
        %v1887 = vrot.slane %v1886, 2
        %v1888 = vadd.f32 %v1886, %v1887
        %v1889 = vrot.slane %v1888, 1
        %v1890 = vadd.f32 %v1888, %v1889
        %v1891 = vrcp.pop 8.0
        %v1892 = vmul.f32 8.0, %v1891
        %v1893 = vsub.f32 1.0, %v1892
        %v1894 = vmul.f32 %v1891, %v1893
        %v1895 = vadd.f32 %v1891, %v1894
        %vm1896 = vweird.f32 %v1891
        %v1897 = vsel %vm1896, %v1891, %v1895
        %v1898 = vmul.f32 %v1890, %v1897
        %v1899 = vld [vmem:[%s17] sm:$0xf]
        %v1900 = vld [vmem:[%s17 + $0x4] sm:$0xf]
        %v1901 = vld [vmem:[%s17 + $0x8] sm:$0xf]
        %v1902 = vld [vmem:[%s17 + $0xc] sm:$0xf]
        %v1903 = vpack.c.bf16 %v1898, %v1898
        %v1904 = vld [vmem:[%s18] sm:$0x1]
        %v1909 = vunpack.c.l.b16 %v1899
        %v1910 = vunpack.c.l.b16 %v1900
        %v1911 = vunpack.c.l.b16 %v1901
        %v1912 = vunpack.c.l.b16 %v1902
        %v1913 = vpack.c.b16 %v1910, %v1909
        %v1914 = vpack.c.b16 %v1912, %v1911
        %v1918 = vsel %vm937, %v1903, 0
        %1920 = vmatpush.bf16.msra.mxu0 0
        %1921 = vmatpush.bf16.msra.mxu0 0
        %1922 = vmatpush.bf16.msra.mxu0 0
        %1923 = vmatpush.bf16.msra.mxu0 0
        %1924 = vmatpush.bf16.msra.mxu0 0
        %1925 = vmatpush.bf16.msra.mxu0 0
        %1926 = vmatpush.bf16.msra.mxu0 %v1914
        %1927 = vmatpush.bf16.msra.mxu0 %v1913
        %1928 = vmatmul.bf16.gmra.mxu0 %v1918
        %v1929 = vpop.f32.mrf.mxu0
        %v1930 = vadd.f32 %v1904, %v1929
        %v1931 = vpop.f32.mrf.mxu0
        %1932 = vdwg.mxu0
        %vm1933 = vcmask 253952
        %1934 = vst.msk [vmem:[%s866] sm:$0x1] %vm1933, %v1930
        %s1935 = sand.u32 %s456, 1
        %s1936 = scalar_lea.sflag [#allocation4], %s1935
        %s1937 = sand.u32 %s456, 1
        %s1938 = scalar_lea.vmem [#allocation29], %s1937
        // Predicated region
        $region165: #{tpu_custom_call.1} parent=95 // pred_check
          %p1939 = pneg %p466
        $region166: #{tpu_custom_call.1} parent=95 // pred_check_branch
          %1941 = sbr.rel (%p1939) target = $region168
        $region167: #{tpu_custom_call.1} parent=95 // pred_region
          %1943 = vsyncadd %s1936, 0
          %s1944 = scalar_lea.hbm %s19, %s44
          %s1946 = sshll.u32 %s1938, 4
          %s1947 = int_to_ptr.vmem [resolvable:$true] %s1946
          %s1948 = sshll.u32 %s1944, 4
          %s1949 = int_to_ptr.hbm [resolvable:$true] %s1948
          %1951 = dma.vmem_to_hbm [thread:$0]  %s1947, 16, %s1949, %s1936
        $region168: #{tpu_custom_call.1} parent=95 // pred_fallthru
          _
      $region96: #{tpu_custom_call.1} parent=5 // pred_fallthru
        _
      %p1952 = scmp.le.s32.totalorder 2, %s39
      // Predicated region
      $region169: #{tpu_custom_call.1} parent=5 // pred_check
        %p1953 = pneg %p1952
      $region170: #{tpu_custom_call.1} parent=5 // pred_check_branch
        %1955 = sbr.rel (%p1953) target = $region172
      $region171: #{tpu_custom_call.1} parent=5 // pred_region
        %s1956 = ssub.s32 %s39, 2
        // Predicated region
        $region173: #{tpu_custom_call.1} parent=171 // pred_check
          %p1957 = pneg %p472
        $region174: #{tpu_custom_call.1} parent=171 // pred_check_branch
          %1959 = sbr.rel (%p1957) target = $region176
        $region175: #{tpu_custom_call.1} parent=171 // pred_region
          %s1960 = sand.u32 %s457, 1
          %s1961 = scalar_lea.sflag [#allocation4], %s1960
          %s1962 = sand.u32 %s457, 1
          %s1963 = scalar_lea.vmem [#allocation29], %s1962
          %1965 = dma.done %s1961, 16
        $region176: #{tpu_custom_call.1} parent=171 // pred_fallthru
          _
      $region172: #{tpu_custom_call.1} parent=5 // pred_fallthru
        _
    $region6: #{tpu_custom_call.1} parent=1 // loop_footer
      %s43 = sadd.s32 1, %s39
    $region7: #{tpu_custom_call.1} parent=1 // loop_footer_branch
      %38 = sbr.rel target = $region3
    $region8: #{tpu_custom_call.1} parent=1 // loop_exit
      _
    %1966 = vsyncpa [#allocation3], 1
    %s1967 = scalar_lea.sflag [#allocation3], 1
    %1968 = vsyncpa %s1967, 1
    %1969 = vsyncpa [#allocation6], 1
    %1970 = vsyncpa [#allocation9], 1
    %1971 = vsyncpa [#allocation12], 1
    %1972 = vsyncpa [#allocation15], 1
    %1973 = vsyncpa [#allocation18], 1
    %1974 = vsyncpa [#allocation21], 1
    %1975 = vsyncpa [#allocation24], 1
    %1976 = vsyncpa [#allocation27], 1
    %1977 = vsyncpa [#allocation4], 1
    %s1978 = scalar_lea.sflag [#allocation4], 1
    %1979 = vsyncpa %s1978, 1

</llo_original>
